<compile_context>
chip_gen: v7x
topology: tpu7x:2x2x1
jax: 0.10.0
libtpu: 0.0.40
codegen_flags: <defaults>
</compile_context>

<pallas_src>
import functools

import jax
import jax.numpy as jnp
from jax.experimental import pallas as pl
from jax.experimental.pallas import tpu as pltpu

NC_PAD = 128            # logits padded to a full lane width
TM_CAP = 256            # max batch-tile rows (fills v6e/v7x 256-row MXU; >=2 steps at large B)
BF16_X_THRESHOLD = 1024 # cast x to bf16 in the wrapper above this many padded rows


def _choose_tm(batch):
    """Batch tile: multiple of 16 (bf16 sublane packing), capped at TM_CAP."""
    tm = ((batch + 15) // 16) * 16
    return max(16, min(TM_CAP, tm))


def improved_nn_kernel(x_ref,
                       w1_ref, t1_ref,
                       w2_ref, t2_ref,
                       w3_ref, t3_ref,
                       w4_ref, b4_ref,
                       o_ref):
    """Fused forward: 3x (linear -> folded-BN shift -> ReLU) -> linear (padded logits).

    Weights are bf16 in VMEM; activations are cast to bf16 only at the MXU
    boundary and accumulated in f32 (preferred_element_type)."""
    x = x_ref[...]

    # Layer 1: fc1 (BN scale folded into w1) -> +shift -> relu   (dropout = identity)
    # Note: K = D_in = 128 only half-fills the 256-deep MXU contraction on v6e/v7x;
    # that is a model-shape limit, not a tuning target.
    h = jnp.dot(x.astype(jnp.bfloat16), w1_ref[...],
                preferred_element_type=jnp.float32)
    h = jnp.maximum(h + t1_ref[...], 0.0)

    # Layer 2
    h = jnp.dot(h.astype(jnp.bfloat16), w2_ref[...],
                preferred_element_type=jnp.float32)
    h = jnp.maximum(h + t2_ref[...], 0.0)

    # Layer 3
    h = jnp.dot(h.astype(jnp.bfloat16), w3_ref[...],
                preferred_element_type=jnp.float32)
    h = jnp.maximum(h + t3_ref[...], 0.0)

    # Layer 4: fc4 (zero-padded to 128 lanes) -> logits (lane-dense store)
    o_ref[...] = (jnp.dot(h.astype(jnp.bfloat16), w4_ref[...],
                          preferred_element_type=jnp.float32)
                  + b4_ref[...]).astype(o_ref.dtype)


@functools.partial(jax.jit, static_argnames=("num_classes",))
def improved_nn_forward(x, params, num_classes):
    (w1, t1, w2, t2, w3, t3, w4, b4) = params
    B, D_in = x.shape
    H1, H2, H3 = w1.shape[1], w2.shape[1], w3.shape[1]

    # Adaptive batch tile; pad batch to a multiple of it.
    TM = _choose_tm(B)
    B_pad = pl.cdiv(B, TM) * TM
    if B_pad != B:
        x = jnp.pad(x, ((0, B_pad - B), (0, 0)))

    # Large-batch regime: halve x HBM traffic (kernel casts to bf16 anyway).
    if B_pad >= BF16_X_THRESHOLD:
        x = x.astype(jnp.bfloat16)

    grid = (B_pad // TM,)

    # Weights / shifts: constant block index -> fetched once, VMEM-resident
    # across all batch tiles.
    def whole(shape):
        return pl.BlockSpec(shape, lambda i: (0, 0))

    flops = 2 * B_pad * (D_in * H1 + H1 * H2 + H2 * H3 + H3 * NC_PAD)
    bytes_accessed = (
        x.size * x.dtype.itemsize
        + (w1.size + w2.size + w3.size + w4.size) * 2          # bf16 weights
        + (t1.size + t2.size + t3.size + b4.size) * 4          # f32 shifts
        + B_pad * NC_PAD * 4                                   # f32 logits out
    )

    out = pl.pallas_call(
        improved_nn_kernel,
        out_shape=jax.ShapeDtypeStruct((B_pad, NC_PAD), jnp.float32),
        grid=grid,
        in_specs=[
            pl.BlockSpec((TM, D_in), lambda i: (i, 0)),   # x: batch-tiled
            whole((D_in, H1)), whole((1, H1)),
            whole((H1, H2)), whole((1, H2)),
            whole((H2, H3)), whole((1, H3)),
            whole((H3, NC_PAD)), whole((1, NC_PAD)),
        ],
        out_specs=pl.BlockSpec((TM, NC_PAD), lambda i: (i, 0)),
        compiler_params=pltpu.CompilerParams(
            dimension_semantics=("parallel",)),
        cost_estimate=pl.CostEstimate(
            flops=flops, transcendentals=0, bytes_accessed=bytes_accessed),
    )(x, w1, t1, w2, t2, w3, t3, w4, b4)

    return out[:B, :num_classes]


def fold_bn_into_linear(w, b, gamma, beta, running_mean, running_var, eps=1e-5):
    """Fold Linear + BatchNorm1d (eval) into w_folded (bf16) and shift (f32).

    bn(x@W + b) = (x@W)*scale + (b - mean)*scale + beta, scale = gamma/sqrt(var+eps)
    """
    scale = gamma / jnp.sqrt(running_var + eps)
    w_folded = (w * scale[None, :]).astype(jnp.bfloat16)
    shift = ((b - running_mean) * scale + beta).reshape(1, -1).astype(jnp.float32)
    return w_folded, shift


def make_params(key, input_dim, num_classes):
    """Deterministic synthetic parameters (shapes match the PyTorch module).

    In a serving setup these folded/padded device arrays should be built once and
    reused across calls (the heavy cost at small batch is the one-time weight DMA).
    """
    dims = [(input_dim, 1024), (1024, 512), (512, 256), (256, num_classes)]
    keys = jax.random.split(key, 16)
    ki = iter(range(16))

    def linear(din, dout):
        bound = 1.0 / jnp.sqrt(din)
        w = jax.random.uniform(keys[next(ki)], (din, dout), jnp.float32, -bound, bound)
        b = jax.random.uniform(keys[next(ki)], (dout,), jnp.float32, -bound, bound)
        return w, b

    def bn(d):
        gamma = 1.0 + 0.1 * jax.random.normal(keys[next(ki)], (d,), jnp.float32)
        beta = 0.05 * jax.random.normal(keys[next(ki)], (d,), jnp.float32)
        rmean = 0.01 * jnp.arange(d, dtype=jnp.float32) / d
        rvar = 1.0 + 0.1 * jnp.cos(jnp.arange(d, dtype=jnp.float32))
        return gamma, beta, rmean, rvar

    w1, b1 = linear(*dims[0]); g1, be1, m1, v1 = bn(1024)
    w2, b2 = linear(*dims[1]); g2, be2, m2, v2 = bn(512)
    w3, b3 = linear(*dims[2]); g3, be3, m3, v3 = bn(256)
    w4, b4 = linear(*dims[3])

    w1f, t1 = fold_bn_into_linear(w1, b1, g1, be1, m1, v1)
    w2f, t2 = fold_bn_into_linear(w2, b2, g2, be2, m2, v2)
    w3f, t3 = fold_bn_into_linear(w3, b3, g3, be3, m3, v3)

    # Final layer: zero-pad logits to 128 lanes for lane-dense output stores.
    w4p = jnp.zeros((dims[3][0], NC_PAD), jnp.float32).at[:, :num_classes].set(w4)
    b4p = jnp.zeros((1, NC_PAD), jnp.float32).at[0, :num_classes].set(b4)
    w4p = w4p.astype(jnp.bfloat16)

    return (w1f, t1, w2f, t2, w3f, t3, w4p, b4p)


def reference_forward(x, params, num_classes):
    """Pure-JAX reference with the same precision policy (bf16 MXU inputs, f32 acc)."""
    (w1, t1, w2, t2, w3, t3, w4, b4) = params

    def mm(a, w):
        return jnp.dot(a.astype(jnp.bfloat16), w, preferred_element_type=jnp.float32)

    h = jnp.maximum(mm(x, w1) + t1, 0.0)
    h = jnp.maximum(mm(h, w2) + t2, 0.0)
    h = jnp.maximum(mm(h, w3) + t3, 0.0)
    out = mm(h, w4) + b4
    return out[:, :num_classes]


if __name__ == "__main__":
    key = jax.random.PRNGKey(0)
    kx, kp = jax.random.split(key)

    batch, input_dim, num_classes = 16, 128, 8
    x = jax.random.normal(kx, (batch, input_dim), jnp.float32)
    params = make_params(kp, input_dim, num_classes)

    out = jax.block_until_ready(improved_nn_forward(x, params, num_classes))
    ref = reference_forward(x, params, num_classes)

    assert out.shape == (batch, num_classes)
    # bf16 weights/activations at the MXU -> relax tolerance vs an f32-only test.
    assert jnp.allclose(out, ref, atol=2e-2, rtol=2e-2), float(
        jnp.max(jnp.abs(out - ref)))
    print("KERNEL_OK")
</pallas_src>

<mosaic_0001>
module attributes {stable_mosaic.version = 11 : i64} {
  func.func @improved_nn_kernel(%arg0: i32, %arg1: memref<16x128xf32, #tpu.memory_space<vmem>>, %arg2: memref<128x1024xbf16, #tpu.memory_space<vmem>>, %arg3: memref<1x1024xf32, #tpu.memory_space<vmem>>, %arg4: memref<1024x512xbf16, #tpu.memory_space<vmem>>, %arg5: memref<1x512xf32, #tpu.memory_space<vmem>>, %arg6: memref<512x256xbf16, #tpu.memory_space<vmem>>, %arg7: memref<1x256xf32, #tpu.memory_space<vmem>>, %arg8: memref<256x128xbf16, #tpu.memory_space<vmem>>, %arg9: memref<1x128xf32, #tpu.memory_space<vmem>>, %arg10: memref<16x128xf32, #tpu.memory_space<vmem>>) attributes {dimension_semantics = [#tpu.dimension_semantics<parallel>], iteration_bounds = array<i64: 1>, scalar_prefetch = 0 : i64, scratch_operands = 0 : i64, tpu.core_type = #tpu.core_type<tc>, window_params = [{transform_indices = @transform_0, window_bounds = array<i64: 16, 128>}, {pipeline_mode = #tpu.pipeline_mode<synchronous>, transform_indices = @transform_1, window_bounds = array<i64: 128, 1024>}, {pipeline_mode = #tpu.pipeline_mode<synchronous>, transform_indices = @transform_2, window_bounds = array<i64: 1, 1024>}, {pipeline_mode = #tpu.pipeline_mode<synchronous>, transform_indices = @transform_3, window_bounds = array<i64: 1024, 512>}, {pipeline_mode = #tpu.pipeline_mode<synchronous>, transform_indices = @transform_4, window_bounds = array<i64: 1, 512>}, {pipeline_mode = #tpu.pipeline_mode<synchronous>, transform_indices = @transform_5, window_bounds = array<i64: 512, 256>}, {pipeline_mode = #tpu.pipeline_mode<synchronous>, transform_indices = @transform_6, window_bounds = array<i64: 1, 256>}, {pipeline_mode = #tpu.pipeline_mode<synchronous>, transform_indices = @transform_7, window_bounds = array<i64: 256, 128>}, {pipeline_mode = #tpu.pipeline_mode<synchronous>, transform_indices = @transform_8, window_bounds = array<i64: 1, 128>}, {transform_indices = @transform_9, window_bounds = array<i64: 16, 128>}]} {
    %c0 = arith.constant 0 : index
    %c0_0 = arith.constant 0 : index
    %0 = vector.load %arg1[%c0, %c0_0] : memref<16x128xf32, #tpu.memory_space<vmem>>, vector<16x128xf32>
    %1 = arith.truncf %0 : vector<16x128xf32> to vector<16x128xbf16>
    %c0_1 = arith.constant 0 : index
    %c0_2 = arith.constant 0 : index
    %2 = vector.load %arg2[%c0_1, %c0_2] : memref<128x1024xbf16, #tpu.memory_space<vmem>>, vector<128x1024xbf16>
    %cst = arith.constant dense<0.000000e+00> : vector<16x1024xf32>
    %3 = tpu.matmul %1, %2, %cst {dimension_numbers = #tpu.dot_dimension_numbers<[1], [0], [0], [1], [0, 0, 1, 1], [], []>} : vector<16x128xbf16>, vector<128x1024xbf16>, vector<16x1024xf32> -> vector<16x1024xf32>
    %c0_3 = arith.constant 0 : index
    %c0_4 = arith.constant 0 : index
    %4 = vector.load %arg3[%c0_3, %c0_4] : memref<1x1024xf32, #tpu.memory_space<vmem>>, vector<1x1024xf32>
    %5 = vector.broadcast %4 : vector<1x1024xf32> to vector<16x1024xf32>
    %6 = arith.addf %3, %5 : vector<16x1024xf32>
    %cst_5 = arith.constant 0.000000e+00 : f32
    %7 = vector.broadcast %cst_5 : f32 to vector<16x1024xf32>
    %8 = arith.maximumf %6, %7 : vector<16x1024xf32>
    %9 = arith.truncf %8 : vector<16x1024xf32> to vector<16x1024xbf16>
    %c0_6 = arith.constant 0 : index
    %c0_7 = arith.constant 0 : index
    %10 = vector.load %arg4[%c0_6, %c0_7] : memref<1024x512xbf16, #tpu.memory_space<vmem>>, vector<1024x512xbf16>
    %cst_8 = arith.constant dense<0.000000e+00> : vector<16x512xf32>
    %11 = tpu.matmul %9, %10, %cst_8 {dimension_numbers = #tpu.dot_dimension_numbers<[1], [0], [0], [1], [0, 0, 1, 1], [], []>} : vector<16x1024xbf16>, vector<1024x512xbf16>, vector<16x512xf32> -> vector<16x512xf32>
    %c0_9 = arith.constant 0 : index
    %c0_10 = arith.constant 0 : index
    %12 = vector.load %arg5[%c0_9, %c0_10] : memref<1x512xf32, #tpu.memory_space<vmem>>, vector<1x512xf32>
    %13 = vector.broadcast %12 : vector<1x512xf32> to vector<16x512xf32>
    %14 = arith.addf %11, %13 : vector<16x512xf32>
    %cst_11 = arith.constant 0.000000e+00 : f32
    %15 = vector.broadcast %cst_11 : f32 to vector<16x512xf32>
    %16 = arith.maximumf %14, %15 : vector<16x512xf32>
    %17 = arith.truncf %16 : vector<16x512xf32> to vector<16x512xbf16>
    %c0_12 = arith.constant 0 : index
    %c0_13 = arith.constant 0 : index
    %18 = vector.load %arg6[%c0_12, %c0_13] : memref<512x256xbf16, #tpu.memory_space<vmem>>, vector<512x256xbf16>
    %cst_14 = arith.constant dense<0.000000e+00> : vector<16x256xf32>
    %19 = tpu.matmul %17, %18, %cst_14 {dimension_numbers = #tpu.dot_dimension_numbers<[1], [0], [0], [1], [0, 0, 1, 1], [], []>} : vector<16x512xbf16>, vector<512x256xbf16>, vector<16x256xf32> -> vector<16x256xf32>
    %c0_15 = arith.constant 0 : index
    %c0_16 = arith.constant 0 : index
    %20 = vector.load %arg7[%c0_15, %c0_16] : memref<1x256xf32, #tpu.memory_space<vmem>>, vector<1x256xf32>
    %21 = vector.broadcast %20 : vector<1x256xf32> to vector<16x256xf32>
    %22 = arith.addf %19, %21 : vector<16x256xf32>
    %cst_17 = arith.constant 0.000000e+00 : f32
    %23 = vector.broadcast %cst_17 : f32 to vector<16x256xf32>
    %24 = arith.maximumf %22, %23 : vector<16x256xf32>
    %25 = arith.truncf %24 : vector<16x256xf32> to vector<16x256xbf16>
    %c0_18 = arith.constant 0 : index
    %c0_19 = arith.constant 0 : index
    %26 = vector.load %arg8[%c0_18, %c0_19] : memref<256x128xbf16, #tpu.memory_space<vmem>>, vector<256x128xbf16>
    %cst_20 = arith.constant dense<0.000000e+00> : vector<16x128xf32>
    %27 = tpu.matmul %25, %26, %cst_20 {dimension_numbers = #tpu.dot_dimension_numbers<[1], [0], [0], [1], [0, 0, 1, 1], [], []>} : vector<16x256xbf16>, vector<256x128xbf16>, vector<16x128xf32> -> vector<16x128xf32>
    %c0_21 = arith.constant 0 : index
    %c0_22 = arith.constant 0 : index
    %28 = vector.load %arg9[%c0_21, %c0_22] : memref<1x128xf32, #tpu.memory_space<vmem>>, vector<1x128xf32>
    %29 = vector.broadcast %28 : vector<1x128xf32> to vector<16x128xf32>
    %30 = arith.addf %27, %29 : vector<16x128xf32>
    %c0_23 = arith.constant 0 : index
    %c0_24 = arith.constant 0 : index
    %31 = vector.load %arg10[%c0_23, %c0_24] : memref<16x128xf32, #tpu.memory_space<vmem>>, vector<16x128xf32>
    tpu.vector_store %arg10[%c0_23, %c0_24], %30 {strides = array<i32>} : memref<16x128xf32, #tpu.memory_space<vmem>>, vector<16x128xf32>,
    return
  }
  func.func @transform_0(%arg0: i32) -> (i32, i32) {
    %c0_i32 = arith.constant 0 : i32
    %c0_i32_0 = arith.constant 0 : i32
    return %arg0, %c0_i32 : i32, i32
  }
  func.func @transform_1(%arg0: i32) -> (i32, i32) {
    %c0_i32 = arith.constant 0 : i32
    %c0_i32_0 = arith.constant 0 : i32
    %c0_i32_1 = arith.constant 0 : i32
    return %c0_i32, %c0_i32_0 : i32, i32
  }
  func.func @transform_2(%arg0: i32) -> (i32, i32) {
    %c0_i32 = arith.constant 0 : i32
    %c0_i32_0 = arith.constant 0 : i32
    %c0_i32_1 = arith.constant 0 : i32
    return %c0_i32, %c0_i32_0 : i32, i32
  }
  func.func @transform_3(%arg0: i32) -> (i32, i32) {
    %c0_i32 = arith.constant 0 : i32
    %c0_i32_0 = arith.constant 0 : i32
    %c0_i32_1 = arith.constant 0 : i32
    return %c0_i32, %c0_i32_0 : i32, i32
  }
  func.func @transform_4(%arg0: i32) -> (i32, i32) {
    %c0_i32 = arith.constant 0 : i32
    %c0_i32_0 = arith.constant 0 : i32
    %c0_i32_1 = arith.constant 0 : i32
    return %c0_i32, %c0_i32_0 : i32, i32
  }
  func.func @transform_5(%arg0: i32) -> (i32, i32) {
    %c0_i32 = arith.constant 0 : i32
    %c0_i32_0 = arith.constant 0 : i32
    %c0_i32_1 = arith.constant 0 : i32
    return %c0_i32, %c0_i32_0 : i32, i32
  }
  func.func @transform_6(%arg0: i32) -> (i32, i32) {
    %c0_i32 = arith.constant 0 : i32
    %c0_i32_0 = arith.constant 0 : i32
    %c0_i32_1 = arith.constant 0 : i32
    return %c0_i32, %c0_i32_0 : i32, i32
  }
  func.func @transform_7(%arg0: i32) -> (i32, i32) {
    %c0_i32 = arith.constant 0 : i32
    %c0_i32_0 = arith.constant 0 : i32
    %c0_i32_1 = arith.constant 0 : i32
    return %c0_i32, %c0_i32_0 : i32, i32
  }
  func.func @transform_8(%arg0: i32) -> (i32, i32) {
    %c0_i32 = arith.constant 0 : i32
    %c0_i32_0 = arith.constant 0 : i32
    %c0_i32_1 = arith.constant 0 : i32
    return %c0_i32, %c0_i32_0 : i32, i32
  }
  func.func @transform_9(%arg0: i32) -> (i32, i32) {
    %c0_i32 = arith.constant 0 : i32
    %c0_i32_0 = arith.constant 0 : i32
    return %arg0, %c0_i32 : i32, i32
  }
}

</mosaic_0001>

<llo_original>
// kernel: improved_nn_forward.1
$region0: #{improved_nn_forward.1}
  #allocation0 [shape = 'u32[]', space=smem, size = 0x4, offset = 0x4, fixed_abs, tag = 'smem constant byte address 0x4 - core index']
  #allocation1 [shape = 'u32[144,128]{1,0:T(1,128)}', space=vmem, size = 0x12000, scoped, tag = 'internal scratch']
  %s0 = inlined_call_operand.hbm [shape: f32[16,128], index: 0, kind: input, shape index: {}]
  %s1 = inlined_call_operand.hbm [shape: bf16[128,1024], index: 1, kind: input, shape index: {}]
  %s2 = inlined_call_operand.hbm [shape: f32[1,1024], index: 2, kind: input, shape index: {}]
  %s3 = inlined_call_operand.hbm [shape: bf16[1024,512], index: 3, kind: input, shape index: {}]
  %s4 = inlined_call_operand.vmem [shape: f32[1,512], index: 4, kind: input, shape index: {}]
  %s5 = inlined_call_operand.hbm [shape: bf16[512,256], index: 5, kind: input, shape index: {}]
  %s6 = inlined_call_operand.vmem [shape: f32[1,256], index: 6, kind: input, shape index: {}]
  %s7 = inlined_call_operand.hbm [shape: bf16[256,128], index: 7, kind: input, shape index: {}]
  %s8 = inlined_call_operand.vmem [shape: f32[1,128], index: 8, kind: input, shape index: {}]
  %s9 = inlined_call_operand.vmem [shape: f32[16,128], index: 9, kind: output, shape index: {}]
  %s10 = sld [smem:[#allocation0]]
  $region70: #{improved_nn_forward.1} parent=0
    _
  %s12 = ssub.s32 1, %s10
  %s13 = scalar_select 0, %s12, %s10
  $region1: #{improved_nn_forward.1} parent=0
    #allocation2 [shape = 'u8[8192]{0}', space=vmem, size = 0x2000, scoped, tag = 'input window, operand 0, single buffered']
    #allocation3 [shape = 's32[1]{0}', space=sflag, size = 0x4, scoped, tag = 'scoped memory for improved_nn_forward.1']
    #allocation4 [shape = 'u8[262144]{0}', space=vmem, size = 0x40000, scoped, tag = 'input window, operand 1, single buffered']
    #allocation5 [shape = 's32[1]{0}', space=sflag, size = 0x4, scoped, tag = 'scoped memory for improved_nn_forward.1']
    #allocation6 [shape = 'u8[4096]{0}', space=vmem, size = 0x1000, scoped, tag = 'input window, operand 2, single buffered']
    #allocation7 [shape = 'u8[1048576]{0}', space=vmem, size = 0x100000, scoped, tag = 'input window, operand 3, single buffered']
    #allocation8 [shape = 's32[1]{0}', space=sflag, size = 0x4, scoped, tag = 'scoped memory for improved_nn_forward.1']
    #allocation9 [shape = 'u8[262144]{0}', space=vmem, size = 0x40000, scoped, tag = 'input window, operand 5, single buffered']
    #allocation10 [shape = 'u8[65536]{0}', space=vmem, size = 0x10000, scoped, tag = 'input window, operand 7, single buffered']
    #allocation11 [shape = 's32[1]{0}', space=sflag, size = 0x4, scoped, tag = 'scoped memory for improved_nn_forward.1']
    %14 = vsyncpa [#allocation3], 0
    %15 = vsyncpa [#allocation5], 0
    %16 = vsyncpa [#allocation8], 0
    %17 = vsyncpa [#allocation11], 0
    // Predicated region
    $region2: #{improved_nn_forward.1} parent=1 // pred_check
      _
    $region3: #{improved_nn_forward.1} parent=1 // pred_check_branch
      %19 = sbr.rel (0) target = $region5
    $region4: #{improved_nn_forward.1} parent=1 // pred_region
      %s21 = ssub.s32 256, 256
      %22 = vsyncadd [#allocation3], %s21
      %s23 = sshll.u32 [#allocation2], 4
      %s24 = int_to_ptr.vmem [resolvable:$true] %s23
      %29 = dma.hbm_to_vmem [thread:$0]  %s0, 256, %s24, [#allocation3], 128, 128, 8
    $region5: #{improved_nn_forward.1} parent=1 // pred_fallthru
      _
    // Predicated region
    $region6: #{improved_nn_forward.1} parent=1 // pred_check
      _
    $region7: #{improved_nn_forward.1} parent=1 // pred_check_branch
      %31 = sbr.rel (0) target = $region9
    $region8: #{improved_nn_forward.1} parent=1 // pred_region
      %s33 = ssub.s32 8192, 8192
      %34 = vsyncadd [#allocation5], %s33
      %s35 = sshll.u32 [#allocation4], 4
      %s36 = int_to_ptr.vmem [resolvable:$true] %s35
      %41 = dma.hbm_to_vmem [thread:$0]  %s1, 8192, %s36, [#allocation5], 512, 512, 32
    $region9: #{improved_nn_forward.1} parent=1 // pred_fallthru
      _
    // Predicated region
    $region10: #{improved_nn_forward.1} parent=1 // pred_check
      _
    $region11: #{improved_nn_forward.1} parent=1 // pred_check_branch
      %43 = sbr.rel (0) target = $region13
    $region12: #{improved_nn_forward.1} parent=1 // pred_region
      %s45 = ssub.s32 128, 128
      %46 = vsyncadd [#allocation5], %s45
      %s48 = sshll.u32 [#allocation6], 4
      %s49 = int_to_ptr.vmem [resolvable:$true] %s48
      %51 = dma.hbm_to_vmem [thread:$0]  %s2, 128, %s49, [#allocation5]
    $region13: #{improved_nn_forward.1} parent=1 // pred_fallthru
      _
    // Predicated region
    $region14: #{improved_nn_forward.1} parent=1 // pred_check
      _
    $region15: #{improved_nn_forward.1} parent=1 // pred_check_branch
      %53 = sbr.rel (0) target = $region17
    $region16: #{improved_nn_forward.1} parent=1 // pred_region
      %s55 = ssub.s32 32768, 32768
      %56 = vsyncadd [#allocation8], %s55
      %s57 = sshll.u32 [#allocation7], 4
      %s58 = int_to_ptr.vmem [resolvable:$true] %s57
      %63 = dma.hbm_to_vmem [thread:$0]  %s3, 32768, %s58, [#allocation8], 256, 256, 16
    $region17: #{improved_nn_forward.1} parent=1 // pred_fallthru
      _
    // Predicated region
    $region18: #{improved_nn_forward.1} parent=1 // pred_check
      _
    $region19: #{improved_nn_forward.1} parent=1 // pred_check_branch
      %65 = sbr.rel (0) target = $region21
    $region20: #{improved_nn_forward.1} parent=1 // pred_region
      _
    $region21: #{improved_nn_forward.1} parent=1 // pred_fallthru
      _
    // Predicated region
    $region22: #{improved_nn_forward.1} parent=1 // pred_check
      _
    $region23: #{improved_nn_forward.1} parent=1 // pred_check_branch
      %67 = sbr.rel (0) target = $region25
    $region24: #{improved_nn_forward.1} parent=1 // pred_region
      %s69 = ssub.s32 8192, 8192
      %70 = vsyncadd [#allocation8], %s69
      %s71 = sshll.u32 [#allocation9], 4
      %s72 = int_to_ptr.vmem [resolvable:$true] %s71
      %77 = dma.hbm_to_vmem [thread:$0]  %s5, 8192, %s72, [#allocation8], 128, 128, 8
    $region25: #{improved_nn_forward.1} parent=1 // pred_fallthru
      _
    // Predicated region
    $region26: #{improved_nn_forward.1} parent=1 // pred_check
      _
    $region27: #{improved_nn_forward.1} parent=1 // pred_check_branch
      %79 = sbr.rel (0) target = $region29
    $region28: #{improved_nn_forward.1} parent=1 // pred_region
      _
    $region29: #{improved_nn_forward.1} parent=1 // pred_fallthru
      _
    // Predicated region
    $region30: #{improved_nn_forward.1} parent=1 // pred_check
      _
    $region31: #{improved_nn_forward.1} parent=1 // pred_check_branch
      %81 = sbr.rel (0) target = $region33
    $region32: #{improved_nn_forward.1} parent=1 // pred_region
      %s83 = ssub.s32 2048, 2048
      %84 = vsyncadd [#allocation11], %s83
      %s85 = sshll.u32 [#allocation10], 4
      %s86 = int_to_ptr.vmem [resolvable:$true] %s85
      %91 = dma.hbm_to_vmem [thread:$0]  %s7, 2048, %s86, [#allocation11], 64, 64, 4
    $region33: #{improved_nn_forward.1} parent=1 // pred_fallthru
      _
    // Predicated region
    $region34: #{improved_nn_forward.1} parent=1 // pred_check
      _
    $region35: #{improved_nn_forward.1} parent=1 // pred_check_branch
      %93 = sbr.rel (0) target = $region37
    $region36: #{improved_nn_forward.1} parent=1 // pred_region
      _
    $region37: #{improved_nn_forward.1} parent=1 // pred_fallthru
      _
    // Predicated region
    $region38: #{improved_nn_forward.1} parent=1 // pred_check
      _
    $region39: #{improved_nn_forward.1} parent=1 // pred_check_branch
      %95 = sbr.rel (0) target = $region41
    $region40: #{improved_nn_forward.1} parent=1 // pred_region
      %96 = dma.done [#allocation3], 256
    $region41: #{improved_nn_forward.1} parent=1 // pred_fallthru
      _
    // Predicated region
    $region42: #{improved_nn_forward.1} parent=1 // pred_check
      _
    $region43: #{improved_nn_forward.1} parent=1 // pred_check_branch
      %98 = sbr.rel (0) target = $region45
    $region44: #{improved_nn_forward.1} parent=1 // pred_region
      %99 = dma.done [#allocation5], 8192
    $region45: #{improved_nn_forward.1} parent=1 // pred_fallthru
      _
    // Predicated region
    $region46: #{improved_nn_forward.1} parent=1 // pred_check
      _
    $region47: #{improved_nn_forward.1} parent=1 // pred_check_branch
      %101 = sbr.rel (0) target = $region49
    $region48: #{improved_nn_forward.1} parent=1 // pred_region
      %102 = dma.done [#allocation5], 128
    $region49: #{improved_nn_forward.1} parent=1 // pred_fallthru
      _
    // Predicated region
    $region50: #{improved_nn_forward.1} parent=1 // pred_check
      _
    $region51: #{improved_nn_forward.1} parent=1 // pred_check_branch
      %104 = sbr.rel (0) target = $region53
    $region52: #{improved_nn_forward.1} parent=1 // pred_region
      %105 = dma.done [#allocation8], 32768
    $region53: #{improved_nn_forward.1} parent=1 // pred_fallthru
      _
    // Predicated region
    $region54: #{improved_nn_forward.1} parent=1 // pred_check
      _
    $region55: #{improved_nn_forward.1} parent=1 // pred_check_branch
      %107 = sbr.rel (0) target = $region57
    $region56: #{improved_nn_forward.1} parent=1 // pred_region
      %108 = dma.done [#allocation8], 8192
    $region57: #{improved_nn_forward.1} parent=1 // pred_fallthru
      _
    // Predicated region
    $region58: #{improved_nn_forward.1} parent=1 // pred_check
      _
    $region59: #{improved_nn_forward.1} parent=1 // pred_check_branch
      %110 = sbr.rel (0) target = $region61
    $region60: #{improved_nn_forward.1} parent=1 // pred_region
      %111 = dma.done [#allocation11], 2048
    $region61: #{improved_nn_forward.1} parent=1 // pred_fallthru
      _
    %v113 = vld [vmem:[#allocation2] sm:$0xff]
    %v114 = vld [vmem:[#allocation2 + $0x8] sm:$0xff]
    %v115 = vpack.c.bf16 %v114, %v113
    %v116 = vld [vmem:[#allocation4] sm:$0xff]
    %v117 = vld [vmem:[#allocation4 + $0x8] sm:$0xff]
    %v118 = vld [vmem:[#allocation4 + $0x10] sm:$0xff]
    %v119 = vld [vmem:[#allocation4 + $0x18] sm:$0xff]
    %v120 = vld [vmem:[#allocation4 + $0x20] sm:$0xff]
    %v121 = vld [vmem:[#allocation4 + $0x28] sm:$0xff]
    %v122 = vld [vmem:[#allocation4 + $0x30] sm:$0xff]
    %v123 = vld [vmem:[#allocation4 + $0x38] sm:$0xff]
    %v124 = vld [vmem:[#allocation4 + $0x40] sm:$0xff]
    %v125 = vld [vmem:[#allocation4 + $0x48] sm:$0xff]
    %v126 = vld [vmem:[#allocation4 + $0x50] sm:$0xff]
    %v127 = vld [vmem:[#allocation4 + $0x58] sm:$0xff]
    %v128 = vld [vmem:[#allocation4 + $0x60] sm:$0xff]
    %v129 = vld [vmem:[#allocation4 + $0x68] sm:$0xff]
    %v130 = vld [vmem:[#allocation4 + $0x70] sm:$0xff]
    %v131 = vld [vmem:[#allocation4 + $0x78] sm:$0xff]
    %v132 = vld [vmem:[#allocation4 + $0x80] sm:$0xff]
    %v133 = vld [vmem:[#allocation4 + $0x88] sm:$0xff]
    %v134 = vld [vmem:[#allocation4 + $0x90] sm:$0xff]
    %v135 = vld [vmem:[#allocation4 + $0x98] sm:$0xff]
    %v136 = vld [vmem:[#allocation4 + $0xa0] sm:$0xff]
    %v137 = vld [vmem:[#allocation4 + $0xa8] sm:$0xff]
    %v138 = vld [vmem:[#allocation4 + $0xb0] sm:$0xff]
    %v139 = vld [vmem:[#allocation4 + $0xb8] sm:$0xff]
    %v140 = vld [vmem:[#allocation4 + $0xc0] sm:$0xff]
    %v141 = vld [vmem:[#allocation4 + $0xc8] sm:$0xff]
    %v142 = vld [vmem:[#allocation4 + $0xd0] sm:$0xff]
    %v143 = vld [vmem:[#allocation4 + $0xd8] sm:$0xff]
    %v144 = vld [vmem:[#allocation4 + $0xe0] sm:$0xff]
    %v145 = vld [vmem:[#allocation4 + $0xe8] sm:$0xff]
    %v146 = vld [vmem:[#allocation4 + $0xf0] sm:$0xff]
    %v147 = vld [vmem:[#allocation4 + $0xf8] sm:$0xff]
    %v148 = vld [vmem:[#allocation4 + $0x100] sm:$0xff]
    %v149 = vld [vmem:[#allocation4 + $0x108] sm:$0xff]
    %v150 = vld [vmem:[#allocation4 + $0x110] sm:$0xff]
    %v151 = vld [vmem:[#allocation4 + $0x118] sm:$0xff]
    %v152 = vld [vmem:[#allocation4 + $0x120] sm:$0xff]
    %v153 = vld [vmem:[#allocation4 + $0x128] sm:$0xff]
    %v154 = vld [vmem:[#allocation4 + $0x130] sm:$0xff]
    %v155 = vld [vmem:[#allocation4 + $0x138] sm:$0xff]
    %v156 = vld [vmem:[#allocation4 + $0x140] sm:$0xff]
    %v157 = vld [vmem:[#allocation4 + $0x148] sm:$0xff]
    %v158 = vld [vmem:[#allocation4 + $0x150] sm:$0xff]
    %v159 = vld [vmem:[#allocation4 + $0x158] sm:$0xff]
    %v160 = vld [vmem:[#allocation4 + $0x160] sm:$0xff]
    %v161 = vld [vmem:[#allocation4 + $0x168] sm:$0xff]
    %v162 = vld [vmem:[#allocation4 + $0x170] sm:$0xff]
    %v163 = vld [vmem:[#allocation4 + $0x178] sm:$0xff]
    %v164 = vld [vmem:[#allocation4 + $0x180] sm:$0xff]
    %v165 = vld [vmem:[#allocation4 + $0x188] sm:$0xff]
    %v166 = vld [vmem:[#allocation4 + $0x190] sm:$0xff]
    %v167 = vld [vmem:[#allocation4 + $0x198] sm:$0xff]
    %v168 = vld [vmem:[#allocation4 + $0x1a0] sm:$0xff]
    %v169 = vld [vmem:[#allocation4 + $0x1a8] sm:$0xff]
    %v170 = vld [vmem:[#allocation4 + $0x1b0] sm:$0xff]
    %v171 = vld [vmem:[#allocation4 + $0x1b8] sm:$0xff]
    %v172 = vld [vmem:[#allocation4 + $0x1c0] sm:$0xff]
    %v173 = vld [vmem:[#allocation4 + $0x1c8] sm:$0xff]
    %v174 = vld [vmem:[#allocation4 + $0x1d0] sm:$0xff]
    %v175 = vld [vmem:[#allocation4 + $0x1d8] sm:$0xff]
    %v176 = vld [vmem:[#allocation4 + $0x1e0] sm:$0xff]
    %v177 = vld [vmem:[#allocation4 + $0x1e8] sm:$0xff]
    %v178 = vld [vmem:[#allocation4 + $0x1f0] sm:$0xff]
    %v179 = vld [vmem:[#allocation4 + $0x1f8] sm:$0xff]
    %v180 = vld [vmem:[#allocation6] sm:$0xff]
    %v182 = vlaneseq
    %v183 = vshrl.u32 %v182, 7
    %v184 = vsub.s32 0, %v183
    %v185 = vrot.slane %v180, %v184
    %v186 = vlaneseq
    %v187 = vshrl.u32 %v186, 7
    %v188 = vsub.s32 1, %v187
    %v189 = vrot.slane %v180, %v188
    %v190 = vlaneseq
    %v191 = vshrl.u32 %v190, 7
    %v192 = vsub.s32 2, %v191
    %v193 = vrot.slane %v180, %v192
    %v194 = vlaneseq
    %v195 = vshrl.u32 %v194, 7
    %v196 = vsub.s32 3, %v195
    %v197 = vrot.slane %v180, %v196
    %v198 = vlaneseq
    %v199 = vshrl.u32 %v198, 7
    %v200 = vsub.s32 4, %v199
    %v201 = vrot.slane %v180, %v200
    %v202 = vlaneseq
    %v203 = vshrl.u32 %v202, 7
    %v204 = vsub.s32 5, %v203
    %v205 = vrot.slane %v180, %v204
    %v206 = vlaneseq
    %v207 = vshrl.u32 %v206, 7
    %v208 = vsub.s32 6, %v207
    %v209 = vrot.slane %v180, %v208
    %v210 = vlaneseq
    %v211 = vshrl.u32 %v210, 7
    %v212 = vsub.s32 7, %v211
    %v213 = vrot.slane %v180, %v212
    %v286 = vunpack.c.l.b16 %v116
    %v287 = vunpack.c.h.b16 %v116
    %v288 = vunpack.c.l.b16 %v117
    %v289 = vunpack.c.h.b16 %v117
    %v290 = vunpack.c.l.b16 %v118
    %v291 = vunpack.c.h.b16 %v118
    %v292 = vunpack.c.l.b16 %v119
    %v293 = vunpack.c.h.b16 %v119
    %v294 = vunpack.c.l.b16 %v120
    %v295 = vunpack.c.h.b16 %v120
    %v296 = vunpack.c.l.b16 %v121
    %v297 = vunpack.c.h.b16 %v121
    %v298 = vunpack.c.l.b16 %v122
    %v299 = vunpack.c.h.b16 %v122
    %v300 = vunpack.c.l.b16 %v123
    %v301 = vunpack.c.h.b16 %v123
    %v302 = vunpack.c.l.b16 %v124
    %v303 = vunpack.c.h.b16 %v124
    %v304 = vunpack.c.l.b16 %v125
    %v305 = vunpack.c.h.b16 %v125
    %v306 = vunpack.c.l.b16 %v126
    %v307 = vunpack.c.h.b16 %v126
    %v308 = vunpack.c.l.b16 %v127
    %v309 = vunpack.c.h.b16 %v127
    %v310 = vunpack.c.l.b16 %v128
    %v311 = vunpack.c.h.b16 %v128
    %v312 = vunpack.c.l.b16 %v129
    %v313 = vunpack.c.h.b16 %v129
    %v314 = vunpack.c.l.b16 %v130
    %v315 = vunpack.c.h.b16 %v130
    %v316 = vunpack.c.l.b16 %v131
    %v317 = vunpack.c.h.b16 %v131
    %v318 = vunpack.c.l.b16 %v132
    %v319 = vunpack.c.h.b16 %v132
    %v320 = vunpack.c.l.b16 %v133
    %v321 = vunpack.c.h.b16 %v133
    %v322 = vunpack.c.l.b16 %v134
    %v323 = vunpack.c.h.b16 %v134
    %v324 = vunpack.c.l.b16 %v135
    %v325 = vunpack.c.h.b16 %v135
    %v326 = vunpack.c.l.b16 %v136
    %v327 = vunpack.c.h.b16 %v136
    %v328 = vunpack.c.l.b16 %v137
    %v329 = vunpack.c.h.b16 %v137
    %v330 = vunpack.c.l.b16 %v138
    %v331 = vunpack.c.h.b16 %v138
    %v332 = vunpack.c.l.b16 %v139
    %v333 = vunpack.c.h.b16 %v139
    %v334 = vunpack.c.l.b16 %v140
    %v335 = vunpack.c.h.b16 %v140
    %v336 = vunpack.c.l.b16 %v141
    %v337 = vunpack.c.h.b16 %v141
    %v338 = vunpack.c.l.b16 %v142
    %v339 = vunpack.c.h.b16 %v142
    %v340 = vunpack.c.l.b16 %v143
    %v341 = vunpack.c.h.b16 %v143
    %v342 = vunpack.c.l.b16 %v144
    %v343 = vunpack.c.h.b16 %v144
    %v344 = vunpack.c.l.b16 %v145
    %v345 = vunpack.c.h.b16 %v145
    %v346 = vunpack.c.l.b16 %v146
    %v347 = vunpack.c.h.b16 %v146
    %v348 = vunpack.c.l.b16 %v147
    %v349 = vunpack.c.h.b16 %v147
    %v350 = vunpack.c.l.b16 %v148
    %v351 = vunpack.c.h.b16 %v148
    %v352 = vunpack.c.l.b16 %v149
    %v353 = vunpack.c.h.b16 %v149
    %v354 = vunpack.c.l.b16 %v150
    %v355 = vunpack.c.h.b16 %v150
    %v356 = vunpack.c.l.b16 %v151
    %v357 = vunpack.c.h.b16 %v151
    %v358 = vunpack.c.l.b16 %v152
    %v359 = vunpack.c.h.b16 %v152
    %v360 = vunpack.c.l.b16 %v153
    %v361 = vunpack.c.h.b16 %v153
    %v362 = vunpack.c.l.b16 %v154
    %v363 = vunpack.c.h.b16 %v154
    %v364 = vunpack.c.l.b16 %v155
    %v365 = vunpack.c.h.b16 %v155
    %v366 = vunpack.c.l.b16 %v156
    %v367 = vunpack.c.h.b16 %v156
    %v368 = vunpack.c.l.b16 %v157
    %v369 = vunpack.c.h.b16 %v157
    %v370 = vunpack.c.l.b16 %v158
    %v371 = vunpack.c.h.b16 %v158
    %v372 = vunpack.c.l.b16 %v159
    %v373 = vunpack.c.h.b16 %v159
    %v374 = vunpack.c.l.b16 %v160
    %v375 = vunpack.c.h.b16 %v160
    %v376 = vunpack.c.l.b16 %v161
    %v377 = vunpack.c.h.b16 %v161
    %v378 = vunpack.c.l.b16 %v162
    %v379 = vunpack.c.h.b16 %v162
    %v380 = vunpack.c.l.b16 %v163
    %v381 = vunpack.c.h.b16 %v163
    %v382 = vunpack.c.l.b16 %v164
    %v383 = vunpack.c.h.b16 %v164
    %v384 = vunpack.c.l.b16 %v165
    %v385 = vunpack.c.h.b16 %v165
    %v386 = vunpack.c.l.b16 %v166
    %v387 = vunpack.c.h.b16 %v166
    %v388 = vunpack.c.l.b16 %v167
    %v389 = vunpack.c.h.b16 %v167
    %v390 = vunpack.c.l.b16 %v168
    %v391 = vunpack.c.h.b16 %v168
    %v392 = vunpack.c.l.b16 %v169
    %v393 = vunpack.c.h.b16 %v169
    %v394 = vunpack.c.l.b16 %v170
    %v395 = vunpack.c.h.b16 %v170
    %v396 = vunpack.c.l.b16 %v171
    %v397 = vunpack.c.h.b16 %v171
    %v398 = vunpack.c.l.b16 %v172
    %v399 = vunpack.c.h.b16 %v172
    %v400 = vunpack.c.l.b16 %v173
    %v401 = vunpack.c.h.b16 %v173
    %v402 = vunpack.c.l.b16 %v174
    %v403 = vunpack.c.h.b16 %v174
    %v404 = vunpack.c.l.b16 %v175
    %v405 = vunpack.c.h.b16 %v175
    %v406 = vunpack.c.l.b16 %v176
    %v407 = vunpack.c.h.b16 %v176
    %v408 = vunpack.c.l.b16 %v177
    %v409 = vunpack.c.h.b16 %v177
    %v410 = vunpack.c.l.b16 %v178
    %v411 = vunpack.c.h.b16 %v178
    %v412 = vunpack.c.l.b16 %v179
    %v413 = vunpack.c.h.b16 %v179
    %v414 = vpack.c.b16 %v294, %v286
    %v415 = vpack.c.b16 %v295, %v287
    %v416 = vpack.c.b16 %v296, %v288
    %v417 = vpack.c.b16 %v297, %v289
    %v418 = vpack.c.b16 %v298, %v290
    %v419 = vpack.c.b16 %v299, %v291
    %v420 = vpack.c.b16 %v300, %v292
    %v421 = vpack.c.b16 %v301, %v293
    %v422 = vpack.c.b16 %v310, %v302
    %v423 = vpack.c.b16 %v311, %v303
    %v424 = vpack.c.b16 %v312, %v304
    %v425 = vpack.c.b16 %v313, %v305
    %v426 = vpack.c.b16 %v314, %v306
    %v427 = vpack.c.b16 %v315, %v307
    %v428 = vpack.c.b16 %v316, %v308
    %v429 = vpack.c.b16 %v317, %v309
    %v430 = vpack.c.b16 %v326, %v318
    %v431 = vpack.c.b16 %v327, %v319
    %v432 = vpack.c.b16 %v328, %v320
    %v433 = vpack.c.b16 %v329, %v321
    %v434 = vpack.c.b16 %v330, %v322
    %v435 = vpack.c.b16 %v331, %v323
    %v436 = vpack.c.b16 %v332, %v324
    %v437 = vpack.c.b16 %v333, %v325
    %v438 = vpack.c.b16 %v342, %v334
    %v439 = vpack.c.b16 %v343, %v335
    %v440 = vpack.c.b16 %v344, %v336
    %v441 = vpack.c.b16 %v345, %v337
    %v442 = vpack.c.b16 %v346, %v338
    %v443 = vpack.c.b16 %v347, %v339
    %v444 = vpack.c.b16 %v348, %v340
    %v445 = vpack.c.b16 %v349, %v341
    %v446 = vpack.c.b16 %v358, %v350
    %v447 = vpack.c.b16 %v359, %v351
    %v448 = vpack.c.b16 %v360, %v352
    %v449 = vpack.c.b16 %v361, %v353
    %v450 = vpack.c.b16 %v362, %v354
    %v451 = vpack.c.b16 %v363, %v355
    %v452 = vpack.c.b16 %v364, %v356
    %v453 = vpack.c.b16 %v365, %v357
    %v454 = vpack.c.b16 %v374, %v366
    %v455 = vpack.c.b16 %v375, %v367
    %v456 = vpack.c.b16 %v376, %v368
    %v457 = vpack.c.b16 %v377, %v369
    %v458 = vpack.c.b16 %v378, %v370
    %v459 = vpack.c.b16 %v379, %v371
    %v460 = vpack.c.b16 %v380, %v372
    %v461 = vpack.c.b16 %v381, %v373
    %v462 = vpack.c.b16 %v390, %v382
    %v463 = vpack.c.b16 %v391, %v383
    %v464 = vpack.c.b16 %v392, %v384
    %v465 = vpack.c.b16 %v393, %v385
    %v466 = vpack.c.b16 %v394, %v386
    %v467 = vpack.c.b16 %v395, %v387
    %v468 = vpack.c.b16 %v396, %v388
    %v469 = vpack.c.b16 %v397, %v389
    %v470 = vpack.c.b16 %v406, %v398
    %v471 = vpack.c.b16 %v407, %v399
    %v472 = vpack.c.b16 %v408, %v400
    %v473 = vpack.c.b16 %v409, %v401
    %v474 = vpack.c.b16 %v410, %v402
    %v475 = vpack.c.b16 %v411, %v403
    %v476 = vpack.c.b16 %v412, %v404
    %v477 = vpack.c.b16 %v413, %v405
    %542 = vmatprep.subr.bf16.mxu0 %v415
    %543 = vmatpush1.bf16.msra.mxu0 %v414
    %544 = vmatprep.subr.bf16.mxu0 %v423
    %545 = vmatpush1.bf16.msra.mxu0 %v422
    %546 = vmatprep.subr.bf16.mxu0 %v431
    %547 = vmatpush1.bf16.msra.mxu0 %v430
    %548 = vmatprep.subr.bf16.mxu0 %v439
    %549 = vmatpush1.bf16.msra.mxu0 %v438
    %550 = vmatprep.subr.bf16.mxu0 %v447
    %551 = vmatpush1.bf16.msra.mxu0 %v446
    %552 = vmatprep.subr.bf16.mxu0 %v455
    %553 = vmatpush1.bf16.msra.mxu0 %v454
    %554 = vmatprep.subr.bf16.mxu0 %v463
    %555 = vmatpush1.bf16.msra.mxu0 %v462
    %556 = vmatprep.subr.bf16.mxu0 %v471
    %557 = vmatpush1.bf16.msra.mxu0 %v470
    %558 = vmatprep.subr.bf16.mxu0 0
    %559 = vmatpush1.bf16.msra.mxu0 0
    %560 = vmatprep.subr.bf16.mxu0 0
    %561 = vmatpush1.bf16.msra.mxu0 0
    %562 = vmatprep.subr.bf16.mxu0 0
    %563 = vmatpush1.bf16.msra.mxu0 0
    %564 = vmatprep.subr.bf16.mxu0 0
    %565 = vmatpush1.bf16.msra.mxu0 0
    %566 = vmatprep.subr.bf16.mxu0 0
    %567 = vmatpush1.bf16.msra.mxu0 0
    %568 = vmatprep.subr.bf16.mxu0 0
    %569 = vmatpush1.bf16.msra.mxu0 0
    %570 = vmatprep.subr.bf16.mxu0 0
    %571 = vmatpush1.bf16.msra.mxu0 0
    %572 = vmatprep.subr.bf16.mxu0 0
    %573 = vmatpush1.bf16.msra.mxu0 0
    %574 = vmatprep.mubr.bf16.mxu0 0
    %575 = vmatmul.mubr.bf16.gmra.mrb[0].mxu0 %v115
    %v576 = vpop.f32.mrb[0].mxu0
    %v577 = vadd.f32 %v185, %v576
    %v578 = vpop.f32.mrb[0].mxu0
    %v579 = vadd.f32 %v189, %v578
    %v580 = vpop.f32.mrb[0].mxu0
    %v581 = vadd.f32 %v185, %v580
    %v582 = vpop.f32.mrb[0].mxu0
    %v583 = vadd.f32 %v189, %v582
    %584 = vdwg.mxu0
    %585 = vmatprep.subr.bf16.mxu0 %v417
    %586 = vmatpush1.bf16.msra.mxu0 %v416
    %587 = vmatprep.subr.bf16.mxu0 %v425
    %588 = vmatpush1.bf16.msra.mxu0 %v424
    %589 = vmatprep.subr.bf16.mxu0 %v433
    %590 = vmatpush1.bf16.msra.mxu0 %v432
    %591 = vmatprep.subr.bf16.mxu0 %v441
    %592 = vmatpush1.bf16.msra.mxu0 %v440
    %593 = vmatprep.subr.bf16.mxu0 %v449
    %594 = vmatpush1.bf16.msra.mxu0 %v448
    %595 = vmatprep.subr.bf16.mxu0 %v457
    %596 = vmatpush1.bf16.msra.mxu0 %v456
    %597 = vmatprep.subr.bf16.mxu0 %v465
    %598 = vmatpush1.bf16.msra.mxu0 %v464
    %599 = vmatprep.subr.bf16.mxu0 %v473
    %600 = vmatpush1.bf16.msra.mxu0 %v472
    %601 = vmatprep.subr.bf16.mxu0 0
    %602 = vmatpush1.bf16.msra.mxu0 0
    %603 = vmatprep.subr.bf16.mxu0 0
    %604 = vmatpush1.bf16.msra.mxu0 0
    %605 = vmatprep.subr.bf16.mxu0 0
    %606 = vmatpush1.bf16.msra.mxu0 0
    %607 = vmatprep.subr.bf16.mxu0 0
    %608 = vmatpush1.bf16.msra.mxu0 0
    %609 = vmatprep.subr.bf16.mxu0 0
    %610 = vmatpush1.bf16.msra.mxu0 0
    %611 = vmatprep.subr.bf16.mxu0 0
    %612 = vmatpush1.bf16.msra.mxu0 0
    %613 = vmatprep.subr.bf16.mxu0 0
    %614 = vmatpush1.bf16.msra.mxu0 0
    %615 = vmatprep.subr.bf16.mxu0 0
    %616 = vmatpush1.bf16.msra.mxu0 0
    %617 = vmatprep.mubr.bf16.mxu0 0
    %618 = vmatmul.mubr.bf16.gmra.mrb[0].mxu0 %v115
    %v619 = vpop.f32.mrb[0].mxu0
    %v620 = vadd.f32 %v193, %v619
    %v621 = vpop.f32.mrb[0].mxu0
    %v622 = vadd.f32 %v197, %v621
    %v623 = vpop.f32.mrb[0].mxu0
    %v624 = vadd.f32 %v193, %v623
    %v625 = vpop.f32.mrb[0].mxu0
    %v626 = vadd.f32 %v197, %v625
    %627 = vdwg.mxu0
    %628 = vmatprep.subr.bf16.mxu0 %v419
    %629 = vmatpush1.bf16.msra.mxu0 %v418
    %630 = vmatprep.subr.bf16.mxu0 %v427
    %631 = vmatpush1.bf16.msra.mxu0 %v426
    %632 = vmatprep.subr.bf16.mxu0 %v435
    %633 = vmatpush1.bf16.msra.mxu0 %v434
    %634 = vmatprep.subr.bf16.mxu0 %v443
    %635 = vmatpush1.bf16.msra.mxu0 %v442
    %636 = vmatprep.subr.bf16.mxu0 %v451
    %637 = vmatpush1.bf16.msra.mxu0 %v450
    %638 = vmatprep.subr.bf16.mxu0 %v459
    %639 = vmatpush1.bf16.msra.mxu0 %v458
    %640 = vmatprep.subr.bf16.mxu0 %v467
    %641 = vmatpush1.bf16.msra.mxu0 %v466
    %642 = vmatprep.subr.bf16.mxu0 %v475
    %643 = vmatpush1.bf16.msra.mxu0 %v474
    %644 = vmatprep.subr.bf16.mxu0 0
    %645 = vmatpush1.bf16.msra.mxu0 0
    %646 = vmatprep.subr.bf16.mxu0 0
    %647 = vmatpush1.bf16.msra.mxu0 0
    %648 = vmatprep.subr.bf16.mxu0 0
    %649 = vmatpush1.bf16.msra.mxu0 0
    %650 = vmatprep.subr.bf16.mxu0 0
    %651 = vmatpush1.bf16.msra.mxu0 0
    %652 = vmatprep.subr.bf16.mxu0 0
    %653 = vmatpush1.bf16.msra.mxu0 0
    %654 = vmatprep.subr.bf16.mxu0 0
    %655 = vmatpush1.bf16.msra.mxu0 0
    %656 = vmatprep.subr.bf16.mxu0 0
    %657 = vmatpush1.bf16.msra.mxu0 0
    %658 = vmatprep.subr.bf16.mxu0 0
    %659 = vmatpush1.bf16.msra.mxu0 0
    %660 = vmatprep.mubr.bf16.mxu0 0
    %661 = vmatmul.mubr.bf16.gmra.mrb[0].mxu0 %v115
    %v662 = vpop.f32.mrb[0].mxu0
    %v663 = vadd.f32 %v201, %v662
    %v664 = vpop.f32.mrb[0].mxu0
    %v665 = vadd.f32 %v205, %v664
    %v666 = vpop.f32.mrb[0].mxu0
    %v667 = vadd.f32 %v201, %v666
    %v668 = vpop.f32.mrb[0].mxu0
    %v669 = vadd.f32 %v205, %v668
    %670 = vdwg.mxu0
    %671 = vmatprep.subr.bf16.mxu0 %v421
    %672 = vmatpush1.bf16.msra.mxu0 %v420
    %673 = vmatprep.subr.bf16.mxu0 %v429
    %674 = vmatpush1.bf16.msra.mxu0 %v428
    %675 = vmatprep.subr.bf16.mxu0 %v437
    %676 = vmatpush1.bf16.msra.mxu0 %v436
    %677 = vmatprep.subr.bf16.mxu0 %v445
    %678 = vmatpush1.bf16.msra.mxu0 %v444
    %679 = vmatprep.subr.bf16.mxu0 %v453
    %680 = vmatpush1.bf16.msra.mxu0 %v452
    %681 = vmatprep.subr.bf16.mxu0 %v461
    %682 = vmatpush1.bf16.msra.mxu0 %v460
    %683 = vmatprep.subr.bf16.mxu0 %v469
    %684 = vmatpush1.bf16.msra.mxu0 %v468
    %685 = vmatprep.subr.bf16.mxu0 %v477
    %686 = vmatpush1.bf16.msra.mxu0 %v476
    %687 = vmatprep.subr.bf16.mxu0 0
    %688 = vmatpush1.bf16.msra.mxu0 0
    %689 = vmatprep.subr.bf16.mxu0 0
    %690 = vmatpush1.bf16.msra.mxu0 0
    %691 = vmatprep.subr.bf16.mxu0 0
    %692 = vmatpush1.bf16.msra.mxu0 0
    %693 = vmatprep.subr.bf16.mxu0 0
    %694 = vmatpush1.bf16.msra.mxu0 0
    %695 = vmatprep.subr.bf16.mxu0 0
    %696 = vmatpush1.bf16.msra.mxu0 0
    %697 = vmatprep.subr.bf16.mxu0 0
    %698 = vmatpush1.bf16.msra.mxu0 0
    %699 = vmatprep.subr.bf16.mxu0 0
    %700 = vmatpush1.bf16.msra.mxu0 0
    %701 = vmatprep.subr.bf16.mxu0 0
    %702 = vmatpush1.bf16.msra.mxu0 0
    %703 = vmatprep.mubr.bf16.mxu0 0
    %704 = vmatmul.mubr.bf16.gmra.mrb[0].mxu0 %v115
    %v705 = vpop.f32.mrb[0].mxu0
    %v706 = vadd.f32 %v209, %v705
    %v707 = vpop.f32.mrb[0].mxu0
    %v708 = vadd.f32 %v213, %v707
    %v709 = vpop.f32.mrb[0].mxu0
    %v710 = vadd.f32 %v209, %v709
    %v711 = vpop.f32.mrb[0].mxu0
    %v712 = vadd.f32 %v213, %v711
    %713 = vdwg.mxu0
    %v714 = vmax.f32 %v577, 0.0
    %v715 = vmax.f32 %v579, 0.0
    %v716 = vmax.f32 %v620, 0.0
    %v717 = vmax.f32 %v622, 0.0
    %v718 = vmax.f32 %v663, 0.0
    %v719 = vmax.f32 %v665, 0.0
    %v720 = vmax.f32 %v706, 0.0
    %v721 = vmax.f32 %v708, 0.0
    %v722 = vmax.f32 %v581, 0.0
    %v723 = vmax.f32 %v583, 0.0
    %v724 = vmax.f32 %v624, 0.0
    %v725 = vmax.f32 %v626, 0.0
    %v726 = vmax.f32 %v667, 0.0
    %v727 = vmax.f32 %v669, 0.0
    %v728 = vmax.f32 %v710, 0.0
    %v729 = vmax.f32 %v712, 0.0
    %v730 = vpack.c.bf16 %v722, %v714
    %v731 = vpack.c.bf16 %v723, %v715
    %v732 = vpack.c.bf16 %v724, %v716
    %v733 = vpack.c.bf16 %v725, %v717
    %v734 = vpack.c.bf16 %v726, %v718
    %v735 = vpack.c.bf16 %v727, %v719
    %v736 = vpack.c.bf16 %v728, %v720
    %v737 = vpack.c.bf16 %v729, %v721
    %v738 = vld [vmem:[#allocation7] sm:$0xff]
    %v739 = vld [vmem:[#allocation7 + $0x8] sm:$0xff]
    %v740 = vld [vmem:[#allocation7 + $0x10] sm:$0xff]
    %v741 = vld [vmem:[#allocation7 + $0x18] sm:$0xff]
    %v742 = vld [vmem:[#allocation7 + $0x20] sm:$0xff]
    %v743 = vld [vmem:[#allocation7 + $0x28] sm:$0xff]
    %v744 = vld [vmem:[#allocation7 + $0x30] sm:$0xff]
    %v745 = vld [vmem:[#allocation7 + $0x38] sm:$0xff]
    %v746 = vld [vmem:[#allocation7 + $0x40] sm:$0xff]
    %v747 = vld [vmem:[#allocation7 + $0x48] sm:$0xff]
    %v748 = vld [vmem:[#allocation7 + $0x50] sm:$0xff]
    %v749 = vld [vmem:[#allocation7 + $0x58] sm:$0xff]
    %v750 = vld [vmem:[#allocation7 + $0x60] sm:$0xff]
    %v751 = vld [vmem:[#allocation7 + $0x68] sm:$0xff]
    %v752 = vld [vmem:[#allocation7 + $0x70] sm:$0xff]
    %v753 = vld [vmem:[#allocation7 + $0x78] sm:$0xff]
    %v754 = vld [vmem:[#allocation7 + $0x80] sm:$0xff]
    %v755 = vld [vmem:[#allocation7 + $0x88] sm:$0xff]
    %v756 = vld [vmem:[#allocation7 + $0x90] sm:$0xff]
    %v757 = vld [vmem:[#allocation7 + $0x98] sm:$0xff]
    %v758 = vld [vmem:[#allocation7 + $0xa0] sm:$0xff]
    %v759 = vld [vmem:[#allocation7 + $0xa8] sm:$0xff]
    %v760 = vld [vmem:[#allocation7 + $0xb0] sm:$0xff]
    %v761 = vld [vmem:[#allocation7 + $0xb8] sm:$0xff]
    %v762 = vld [vmem:[#allocation7 + $0xc0] sm:$0xff]
    %v763 = vld [vmem:[#allocation7 + $0xc8] sm:$0xff]
    %v764 = vld [vmem:[#allocation7 + $0xd0] sm:$0xff]
    %v765 = vld [vmem:[#allocation7 + $0xd8] sm:$0xff]
    %v766 = vld [vmem:[#allocation7 + $0xe0] sm:$0xff]
    %v767 = vld [vmem:[#allocation7 + $0xe8] sm:$0xff]
    %v768 = vld [vmem:[#allocation7 + $0xf0] sm:$0xff]
    %v769 = vld [vmem:[#allocation7 + $0xf8] sm:$0xff]
    %v770 = vld [vmem:[#allocation7 + $0x100] sm:$0xff]
    %v771 = vld [vmem:[#allocation7 + $0x108] sm:$0xff]
    %v772 = vld [vmem:[#allocation7 + $0x110] sm:$0xff]
    %v773 = vld [vmem:[#allocation7 + $0x118] sm:$0xff]
    %v774 = vld [vmem:[#allocation7 + $0x120] sm:$0xff]
    %v775 = vld [vmem:[#allocation7 + $0x128] sm:$0xff]
    %v776 = vld [vmem:[#allocation7 + $0x130] sm:$0xff]
    %v777 = vld [vmem:[#allocation7 + $0x138] sm:$0xff]
    %v778 = vld [vmem:[#allocation7 + $0x140] sm:$0xff]
    %v779 = vld [vmem:[#allocation7 + $0x148] sm:$0xff]
    %v780 = vld [vmem:[#allocation7 + $0x150] sm:$0xff]
    %v781 = vld [vmem:[#allocation7 + $0x158] sm:$0xff]
    %v782 = vld [vmem:[#allocation7 + $0x160] sm:$0xff]
    %v783 = vld [vmem:[#allocation7 + $0x168] sm:$0xff]
    %v784 = vld [vmem:[#allocation7 + $0x170] sm:$0xff]
    %v785 = vld [vmem:[#allocation7 + $0x178] sm:$0xff]
    %v786 = vld [vmem:[#allocation7 + $0x180] sm:$0xff]
    %v787 = vld [vmem:[#allocation7 + $0x188] sm:$0xff]
    %v788 = vld [vmem:[#allocation7 + $0x190] sm:$0xff]
    %v789 = vld [vmem:[#allocation7 + $0x198] sm:$0xff]
    %v790 = vld [vmem:[#allocation7 + $0x1a0] sm:$0xff]
    %v791 = vld [vmem:[#allocation7 + $0x1a8] sm:$0xff]
    %v792 = vld [vmem:[#allocation7 + $0x1b0] sm:$0xff]
    %v793 = vld [vmem:[#allocation7 + $0x1b8] sm:$0xff]
    %v794 = vld [vmem:[#allocation7 + $0x1c0] sm:$0xff]
    %v795 = vld [vmem:[#allocation7 + $0x1c8] sm:$0xff]
    %v796 = vld [vmem:[#allocation7 + $0x1d0] sm:$0xff]
    %v797 = vld [vmem:[#allocation7 + $0x1d8] sm:$0xff]
    %v798 = vld [vmem:[#allocation7 + $0x1e0] sm:$0xff]
    %v799 = vld [vmem:[#allocation7 + $0x1e8] sm:$0xff]
    %v800 = vld [vmem:[#allocation7 + $0x1f0] sm:$0xff]
    %v801 = vld [vmem:[#allocation7 + $0x1f8] sm:$0xff]
    %v802 = vld [vmem:[#allocation7 + $0x200] sm:$0xff]
    %v803 = vld [vmem:[#allocation7 + $0x208] sm:$0xff]
    %v804 = vld [vmem:[#allocation7 + $0x210] sm:$0xff]
    %v805 = vld [vmem:[#allocation7 + $0x218] sm:$0xff]
    %v806 = vld [vmem:[#allocation7 + $0x220] sm:$0xff]
    %v807 = vld [vmem:[#allocation7 + $0x228] sm:$0xff]
    %v808 = vld [vmem:[#allocation7 + $0x230] sm:$0xff]
    %v809 = vld [vmem:[#allocation7 + $0x238] sm:$0xff]
    %v810 = vld [vmem:[#allocation7 + $0x240] sm:$0xff]
    %v811 = vld [vmem:[#allocation7 + $0x248] sm:$0xff]
    %v812 = vld [vmem:[#allocation7 + $0x250] sm:$0xff]
    %v813 = vld [vmem:[#allocation7 + $0x258] sm:$0xff]
    %v814 = vld [vmem:[#allocation7 + $0x260] sm:$0xff]
    %v815 = vld [vmem:[#allocation7 + $0x268] sm:$0xff]
    %v816 = vld [vmem:[#allocation7 + $0x270] sm:$0xff]
    %v817 = vld [vmem:[#allocation7 + $0x278] sm:$0xff]
    %v818 = vld [vmem:[#allocation7 + $0x280] sm:$0xff]
    %v819 = vld [vmem:[#allocation7 + $0x288] sm:$0xff]
    %v820 = vld [vmem:[#allocation7 + $0x290] sm:$0xff]
    %v821 = vld [vmem:[#allocation7 + $0x298] sm:$0xff]
    %v822 = vld [vmem:[#allocation7 + $0x2a0] sm:$0xff]
    %v823 = vld [vmem:[#allocation7 + $0x2a8] sm:$0xff]
    %v824 = vld [vmem:[#allocation7 + $0x2b0] sm:$0xff]
    %v825 = vld [vmem:[#allocation7 + $0x2b8] sm:$0xff]
    %v826 = vld [vmem:[#allocation7 + $0x2c0] sm:$0xff]
    %v827 = vld [vmem:[#allocation7 + $0x2c8] sm:$0xff]
    %v828 = vld [vmem:[#allocation7 + $0x2d0] sm:$0xff]
    %v829 = vld [vmem:[#allocation7 + $0x2d8] sm:$0xff]
    %v830 = vld [vmem:[#allocation7 + $0x2e0] sm:$0xff]
    %v831 = vld [vmem:[#allocation7 + $0x2e8] sm:$0xff]
    %v832 = vld [vmem:[#allocation7 + $0x2f0] sm:$0xff]
    %v833 = vld [vmem:[#allocation7 + $0x2f8] sm:$0xff]
    %v834 = vld [vmem:[#allocation7 + $0x300] sm:$0xff]
    %v835 = vld [vmem:[#allocation7 + $0x308] sm:$0xff]
    %v836 = vld [vmem:[#allocation7 + $0x310] sm:$0xff]
    %v837 = vld [vmem:[#allocation7 + $0x318] sm:$0xff]
    %v838 = vld [vmem:[#allocation7 + $0x320] sm:$0xff]
    %v839 = vld [vmem:[#allocation7 + $0x328] sm:$0xff]
    %v840 = vld [vmem:[#allocation7 + $0x330] sm:$0xff]
    %v841 = vld [vmem:[#allocation7 + $0x338] sm:$0xff]
    %v842 = vld [vmem:[#allocation7 + $0x340] sm:$0xff]
    %v843 = vld [vmem:[#allocation7 + $0x348] sm:$0xff]
    %v844 = vld [vmem:[#allocation7 + $0x350] sm:$0xff]
    %v845 = vld [vmem:[#allocation7 + $0x358] sm:$0xff]
    %v846 = vld [vmem:[#allocation7 + $0x360] sm:$0xff]
    %v847 = vld [vmem:[#allocation7 + $0x368] sm:$0xff]
    %v848 = vld [vmem:[#allocation7 + $0x370] sm:$0xff]
    %v849 = vld [vmem:[#allocation7 + $0x378] sm:$0xff]
    %v850 = vld [vmem:[#allocation7 + $0x380] sm:$0xff]
    %v851 = vld [vmem:[#allocation7 + $0x388] sm:$0xff]
    %v852 = vld [vmem:[#allocation7 + $0x390] sm:$0xff]
    %v853 = vld [vmem:[#allocation7 + $0x398] sm:$0xff]
    %v854 = vld [vmem:[#allocation7 + $0x3a0] sm:$0xff]
    %v855 = vld [vmem:[#allocation7 + $0x3a8] sm:$0xff]
    %v856 = vld [vmem:[#allocation7 + $0x3b0] sm:$0xff]
    %v857 = vld [vmem:[#allocation7 + $0x3b8] sm:$0xff]
    %v858 = vld [vmem:[#allocation7 + $0x3c0] sm:$0xff]
    %v859 = vld [vmem:[#allocation7 + $0x3c8] sm:$0xff]
    %v860 = vld [vmem:[#allocation7 + $0x3d0] sm:$0xff]
    %v861 = vld [vmem:[#allocation7 + $0x3d8] sm:$0xff]
    %v862 = vld [vmem:[#allocation7 + $0x3e0] sm:$0xff]
    %v863 = vld [vmem:[#allocation7 + $0x3e8] sm:$0xff]
    %v864 = vld [vmem:[#allocation7 + $0x3f0] sm:$0xff]
    %v865 = vld [vmem:[#allocation7 + $0x3f8] sm:$0xff]
    %v866 = vld [vmem:[#allocation7 + $0x400] sm:$0xff]
    %v867 = vld [vmem:[#allocation7 + $0x408] sm:$0xff]
    %v868 = vld [vmem:[#allocation7 + $0x410] sm:$0xff]
    %v869 = vld [vmem:[#allocation7 + $0x418] sm:$0xff]
    %v870 = vld [vmem:[#allocation7 + $0x420] sm:$0xff]
    %v871 = vld [vmem:[#allocation7 + $0x428] sm:$0xff]
    %v872 = vld [vmem:[#allocation7 + $0x430] sm:$0xff]
    %v873 = vld [vmem:[#allocation7 + $0x438] sm:$0xff]
    %v874 = vld [vmem:[#allocation7 + $0x440] sm:$0xff]
    %v875 = vld [vmem:[#allocation7 + $0x448] sm:$0xff]
    %v876 = vld [vmem:[#allocation7 + $0x450] sm:$0xff]
    %v877 = vld [vmem:[#allocation7 + $0x458] sm:$0xff]
    %v878 = vld [vmem:[#allocation7 + $0x460] sm:$0xff]
    %v879 = vld [vmem:[#allocation7 + $0x468] sm:$0xff]
    %v880 = vld [vmem:[#allocation7 + $0x470] sm:$0xff]
    %v881 = vld [vmem:[#allocation7 + $0x478] sm:$0xff]
    %v882 = vld [vmem:[#allocation7 + $0x480] sm:$0xff]
    %v883 = vld [vmem:[#allocation7 + $0x488] sm:$0xff]
    %v884 = vld [vmem:[#allocation7 + $0x490] sm:$0xff]
    %v885 = vld [vmem:[#allocation7 + $0x498] sm:$0xff]
    %v886 = vld [vmem:[#allocation7 + $0x4a0] sm:$0xff]
    %v887 = vld [vmem:[#allocation7 + $0x4a8] sm:$0xff]
    %v888 = vld [vmem:[#allocation7 + $0x4b0] sm:$0xff]
    %v889 = vld [vmem:[#allocation7 + $0x4b8] sm:$0xff]
    %v890 = vld [vmem:[#allocation7 + $0x4c0] sm:$0xff]
    %v891 = vld [vmem:[#allocation7 + $0x4c8] sm:$0xff]
    %v892 = vld [vmem:[#allocation7 + $0x4d0] sm:$0xff]
    %v893 = vld [vmem:[#allocation7 + $0x4d8] sm:$0xff]
    %v894 = vld [vmem:[#allocation7 + $0x4e0] sm:$0xff]
    %v895 = vld [vmem:[#allocation7 + $0x4e8] sm:$0xff]
    %v896 = vld [vmem:[#allocation7 + $0x4f0] sm:$0xff]
    %v897 = vld [vmem:[#allocation7 + $0x4f8] sm:$0xff]
    %v898 = vld [vmem:[#allocation7 + $0x500] sm:$0xff]
    %v899 = vld [vmem:[#allocation7 + $0x508] sm:$0xff]
    %v900 = vld [vmem:[#allocation7 + $0x510] sm:$0xff]
    %v901 = vld [vmem:[#allocation7 + $0x518] sm:$0xff]
    %v902 = vld [vmem:[#allocation7 + $0x520] sm:$0xff]
    %v903 = vld [vmem:[#allocation7 + $0x528] sm:$0xff]
    %v904 = vld [vmem:[#allocation7 + $0x530] sm:$0xff]
    %v905 = vld [vmem:[#allocation7 + $0x538] sm:$0xff]
    %v906 = vld [vmem:[#allocation7 + $0x540] sm:$0xff]
    %v907 = vld [vmem:[#allocation7 + $0x548] sm:$0xff]
    %v908 = vld [vmem:[#allocation7 + $0x550] sm:$0xff]
    %v909 = vld [vmem:[#allocation7 + $0x558] sm:$0xff]
    %v910 = vld [vmem:[#allocation7 + $0x560] sm:$0xff]
    %v911 = vld [vmem:[#allocation7 + $0x568] sm:$0xff]
    %v912 = vld [vmem:[#allocation7 + $0x570] sm:$0xff]
    %v913 = vld [vmem:[#allocation7 + $0x578] sm:$0xff]
    %v914 = vld [vmem:[#allocation7 + $0x580] sm:$0xff]
    %v915 = vld [vmem:[#allocation7 + $0x588] sm:$0xff]
    %v916 = vld [vmem:[#allocation7 + $0x590] sm:$0xff]
    %v917 = vld [vmem:[#allocation7 + $0x598] sm:$0xff]
    %v918 = vld [vmem:[#allocation7 + $0x5a0] sm:$0xff]
    %v919 = vld [vmem:[#allocation7 + $0x5a8] sm:$0xff]
    %v920 = vld [vmem:[#allocation7 + $0x5b0] sm:$0xff]
    %v921 = vld [vmem:[#allocation7 + $0x5b8] sm:$0xff]
    %v922 = vld [vmem:[#allocation7 + $0x5c0] sm:$0xff]
    %v923 = vld [vmem:[#allocation7 + $0x5c8] sm:$0xff]
    %v924 = vld [vmem:[#allocation7 + $0x5d0] sm:$0xff]
    %v925 = vld [vmem:[#allocation7 + $0x5d8] sm:$0xff]
    %v926 = vld [vmem:[#allocation7 + $0x5e0] sm:$0xff]
    %v927 = vld [vmem:[#allocation7 + $0x5e8] sm:$0xff]
    %v928 = vld [vmem:[#allocation7 + $0x5f0] sm:$0xff]
    %v929 = vld [vmem:[#allocation7 + $0x5f8] sm:$0xff]
    %v930 = vld [vmem:[#allocation7 + $0x600] sm:$0xff]
    %v931 = vld [vmem:[#allocation7 + $0x608] sm:$0xff]
    %v932 = vld [vmem:[#allocation7 + $0x610] sm:$0xff]
    %v933 = vld [vmem:[#allocation7 + $0x618] sm:$0xff]
    %v934 = vld [vmem:[#allocation7 + $0x620] sm:$0xff]
    %v935 = vld [vmem:[#allocation7 + $0x628] sm:$0xff]
    %v936 = vld [vmem:[#allocation7 + $0x630] sm:$0xff]
    %v937 = vld [vmem:[#allocation7 + $0x638] sm:$0xff]
    %v938 = vld [vmem:[#allocation7 + $0x640] sm:$0xff]
    %v939 = vld [vmem:[#allocation7 + $0x648] sm:$0xff]
    %v940 = vld [vmem:[#allocation7 + $0x650] sm:$0xff]
    %v941 = vld [vmem:[#allocation7 + $0x658] sm:$0xff]
    %v942 = vld [vmem:[#allocation7 + $0x660] sm:$0xff]
    %v943 = vld [vmem:[#allocation7 + $0x668] sm:$0xff]
    %v944 = vld [vmem:[#allocation7 + $0x670] sm:$0xff]
    %v945 = vld [vmem:[#allocation7 + $0x678] sm:$0xff]
    %v946 = vld [vmem:[#allocation7 + $0x680] sm:$0xff]
    %v947 = vld [vmem:[#allocation7 + $0x688] sm:$0xff]
    %v948 = vld [vmem:[#allocation7 + $0x690] sm:$0xff]
    %v949 = vld [vmem:[#allocation7 + $0x698] sm:$0xff]
    %v950 = vld [vmem:[#allocation7 + $0x6a0] sm:$0xff]
    %v951 = vld [vmem:[#allocation7 + $0x6a8] sm:$0xff]
    %v952 = vld [vmem:[#allocation7 + $0x6b0] sm:$0xff]
    %v953 = vld [vmem:[#allocation7 + $0x6b8] sm:$0xff]
    %v954 = vld [vmem:[#allocation7 + $0x6c0] sm:$0xff]
    %v955 = vld [vmem:[#allocation7 + $0x6c8] sm:$0xff]
    %v956 = vld [vmem:[#allocation7 + $0x6d0] sm:$0xff]
    %v957 = vld [vmem:[#allocation7 + $0x6d8] sm:$0xff]
    %v958 = vld [vmem:[#allocation7 + $0x6e0] sm:$0xff]
    %v959 = vld [vmem:[#allocation7 + $0x6e8] sm:$0xff]
    %v960 = vld [vmem:[#allocation7 + $0x6f0] sm:$0xff]
    %v961 = vld [vmem:[#allocation7 + $0x6f8] sm:$0xff]
    %v962 = vld [vmem:[#allocation7 + $0x700] sm:$0xff]
    %v963 = vld [vmem:[#allocation7 + $0x708] sm:$0xff]
    %v964 = vld [vmem:[#allocation7 + $0x710] sm:$0xff]
    %v965 = vld [vmem:[#allocation7 + $0x718] sm:$0xff]
    %v966 = vld [vmem:[#allocation7 + $0x720] sm:$0xff]
    %v967 = vld [vmem:[#allocation7 + $0x728] sm:$0xff]
    %v968 = vld [vmem:[#allocation7 + $0x730] sm:$0xff]
    %v969 = vld [vmem:[#allocation7 + $0x738] sm:$0xff]
    %v970 = vld [vmem:[#allocation7 + $0x740] sm:$0xff]
    %v971 = vld [vmem:[#allocation7 + $0x748] sm:$0xff]
    %v972 = vld [vmem:[#allocation7 + $0x750] sm:$0xff]
    %v973 = vld [vmem:[#allocation7 + $0x758] sm:$0xff]
    %v974 = vld [vmem:[#allocation7 + $0x760] sm:$0xff]
    %v975 = vld [vmem:[#allocation7 + $0x768] sm:$0xff]
    %v976 = vld [vmem:[#allocation7 + $0x770] sm:$0xff]
    %v977 = vld [vmem:[#allocation7 + $0x778] sm:$0xff]
    %v978 = vld [vmem:[#allocation7 + $0x780] sm:$0xff]
    %v979 = vld [vmem:[#allocation7 + $0x788] sm:$0xff]
    %v980 = vld [vmem:[#allocation7 + $0x790] sm:$0xff]
    %v981 = vld [vmem:[#allocation7 + $0x798] sm:$0xff]
    %v982 = vld [vmem:[#allocation7 + $0x7a0] sm:$0xff]
    %v983 = vld [vmem:[#allocation7 + $0x7a8] sm:$0xff]
    %v984 = vld [vmem:[#allocation7 + $0x7b0] sm:$0xff]
    %v985 = vld [vmem:[#allocation7 + $0x7b8] sm:$0xff]
    %v986 = vld [vmem:[#allocation7 + $0x7c0] sm:$0xff]
    %v987 = vld [vmem:[#allocation7 + $0x7c8] sm:$0xff]
    %v988 = vld [vmem:[#allocation7 + $0x7d0] sm:$0xff]
    %v989 = vld [vmem:[#allocation7 + $0x7d8] sm:$0xff]
    %v990 = vld [vmem:[#allocation7 + $0x7e0] sm:$0xff]
    %v991 = vld [vmem:[#allocation7 + $0x7e8] sm:$0xff]
    %v992 = vld [vmem:[#allocation7 + $0x7f0] sm:$0xff]
    %v993 = vld [vmem:[#allocation7 + $0x7f8] sm:$0xff]
    %v994 = vld [vmem:[%s4] sm:$0xf]
    %v996 = vlaneseq
    %v997 = vshrl.u32 %v996, 7
    %v998 = vsub.s32 0, %v997
    %v999 = vrot.slane %v994, %v998
    %v1000 = vlaneseq
    %v1001 = vshrl.u32 %v1000, 7
    %v1002 = vsub.s32 1, %v1001
    %v1003 = vrot.slane %v994, %v1002
    %v1004 = vlaneseq
    %v1005 = vshrl.u32 %v1004, 7
    %v1006 = vsub.s32 2, %v1005
    %v1007 = vrot.slane %v994, %v1006
    %v1008 = vlaneseq
    %v1009 = vshrl.u32 %v1008, 7
    %v1010 = vsub.s32 3, %v1009
    %v1011 = vrot.slane %v994, %v1010
    %v1272 = vunpack.c.l.b16 %v738
    %v1273 = vunpack.c.h.b16 %v738
    %v1274 = vunpack.c.l.b16 %v739
    %v1275 = vunpack.c.h.b16 %v739
    %v1276 = vunpack.c.l.b16 %v740
    %v1277 = vunpack.c.h.b16 %v740
    %v1278 = vunpack.c.l.b16 %v741
    %v1279 = vunpack.c.h.b16 %v741
    %v1280 = vunpack.c.l.b16 %v742
    %v1281 = vunpack.c.h.b16 %v742
    %v1282 = vunpack.c.l.b16 %v743
    %v1283 = vunpack.c.h.b16 %v743
    %v1284 = vunpack.c.l.b16 %v744
    %v1285 = vunpack.c.h.b16 %v744
    %v1286 = vunpack.c.l.b16 %v745
    %v1287 = vunpack.c.h.b16 %v745
    %v1288 = vunpack.c.l.b16 %v746
    %v1289 = vunpack.c.h.b16 %v746
    %v1290 = vunpack.c.l.b16 %v747
    %v1291 = vunpack.c.h.b16 %v747
    %v1292 = vunpack.c.l.b16 %v748
    %v1293 = vunpack.c.h.b16 %v748
    %v1294 = vunpack.c.l.b16 %v749
    %v1295 = vunpack.c.h.b16 %v749
    %v1296 = vunpack.c.l.b16 %v750
    %v1297 = vunpack.c.h.b16 %v750
    %v1298 = vunpack.c.l.b16 %v751
    %v1299 = vunpack.c.h.b16 %v751
    %v1300 = vunpack.c.l.b16 %v752
    %v1301 = vunpack.c.h.b16 %v752
    %v1302 = vunpack.c.l.b16 %v753
    %v1303 = vunpack.c.h.b16 %v753
    %v1304 = vunpack.c.l.b16 %v754
    %v1305 = vunpack.c.h.b16 %v754
    %v1306 = vunpack.c.l.b16 %v755
    %v1307 = vunpack.c.h.b16 %v755
    %v1308 = vunpack.c.l.b16 %v756
    %v1309 = vunpack.c.h.b16 %v756
    %v1310 = vunpack.c.l.b16 %v757
    %v1311 = vunpack.c.h.b16 %v757
    %v1312 = vunpack.c.l.b16 %v758
    %v1313 = vunpack.c.h.b16 %v758
    %v1314 = vunpack.c.l.b16 %v759
    %v1315 = vunpack.c.h.b16 %v759
    %v1316 = vunpack.c.l.b16 %v760
    %v1317 = vunpack.c.h.b16 %v760
    %v1318 = vunpack.c.l.b16 %v761
    %v1319 = vunpack.c.h.b16 %v761
    %v1320 = vunpack.c.l.b16 %v762
    %v1321 = vunpack.c.h.b16 %v762
    %v1322 = vunpack.c.l.b16 %v763
    %v1323 = vunpack.c.h.b16 %v763
    %v1324 = vunpack.c.l.b16 %v764
    %v1325 = vunpack.c.h.b16 %v764
    %v1326 = vunpack.c.l.b16 %v765
    %v1327 = vunpack.c.h.b16 %v765
    %v1328 = vunpack.c.l.b16 %v766
    %v1329 = vunpack.c.h.b16 %v766
    %v1330 = vunpack.c.l.b16 %v767
    %v1331 = vunpack.c.h.b16 %v767
    %v1332 = vunpack.c.l.b16 %v768
    %v1333 = vunpack.c.h.b16 %v768
    %v1334 = vunpack.c.l.b16 %v769
    %v1335 = vunpack.c.h.b16 %v769
    %v1336 = vunpack.c.l.b16 %v770
    %v1337 = vunpack.c.h.b16 %v770
    %v1338 = vunpack.c.l.b16 %v771
    %v1339 = vunpack.c.h.b16 %v771
    %v1340 = vunpack.c.l.b16 %v772
    %v1341 = vunpack.c.h.b16 %v772
    %v1342 = vunpack.c.l.b16 %v773
    %v1343 = vunpack.c.h.b16 %v773
    %v1344 = vunpack.c.l.b16 %v774
    %v1345 = vunpack.c.h.b16 %v774
    %v1346 = vunpack.c.l.b16 %v775
    %v1347 = vunpack.c.h.b16 %v775
    %v1348 = vunpack.c.l.b16 %v776
    %v1349 = vunpack.c.h.b16 %v776
    %v1350 = vunpack.c.l.b16 %v777
    %v1351 = vunpack.c.h.b16 %v777
    %v1352 = vunpack.c.l.b16 %v778
    %v1353 = vunpack.c.h.b16 %v778
    %v1354 = vunpack.c.l.b16 %v779
    %v1355 = vunpack.c.h.b16 %v779
    %v1356 = vunpack.c.l.b16 %v780
    %v1357 = vunpack.c.h.b16 %v780
    %v1358 = vunpack.c.l.b16 %v781
    %v1359 = vunpack.c.h.b16 %v781
    %v1360 = vunpack.c.l.b16 %v782
    %v1361 = vunpack.c.h.b16 %v782
    %v1362 = vunpack.c.l.b16 %v783
    %v1363 = vunpack.c.h.b16 %v783
    %v1364 = vunpack.c.l.b16 %v784
    %v1365 = vunpack.c.h.b16 %v784
    %v1366 = vunpack.c.l.b16 %v785
    %v1367 = vunpack.c.h.b16 %v785
    %v1368 = vunpack.c.l.b16 %v786
    %v1369 = vunpack.c.h.b16 %v786
    %v1370 = vunpack.c.l.b16 %v787
    %v1371 = vunpack.c.h.b16 %v787
    %v1372 = vunpack.c.l.b16 %v788
    %v1373 = vunpack.c.h.b16 %v788
    %v1374 = vunpack.c.l.b16 %v789
    %v1375 = vunpack.c.h.b16 %v789
    %v1376 = vunpack.c.l.b16 %v790
    %v1377 = vunpack.c.h.b16 %v790
    %v1378 = vunpack.c.l.b16 %v791
    %v1379 = vunpack.c.h.b16 %v791
    %v1380 = vunpack.c.l.b16 %v792
    %v1381 = vunpack.c.h.b16 %v792
    %v1382 = vunpack.c.l.b16 %v793
    %v1383 = vunpack.c.h.b16 %v793
    %v1384 = vunpack.c.l.b16 %v794
    %v1385 = vunpack.c.h.b16 %v794
    %v1386 = vunpack.c.l.b16 %v795
    %v1387 = vunpack.c.h.b16 %v795
    %v1388 = vunpack.c.l.b16 %v796
    %v1389 = vunpack.c.h.b16 %v796
    %v1390 = vunpack.c.l.b16 %v797
    %v1391 = vunpack.c.h.b16 %v797
    %v1392 = vunpack.c.l.b16 %v798
    %v1393 = vunpack.c.h.b16 %v798
    %v1394 = vunpack.c.l.b16 %v799
    %v1395 = vunpack.c.h.b16 %v799
    %v1396 = vunpack.c.l.b16 %v800
    %v1397 = vunpack.c.h.b16 %v800
    %v1398 = vunpack.c.l.b16 %v801
    %v1399 = vunpack.c.h.b16 %v801
    %v1400 = vunpack.c.l.b16 %v802
    %v1401 = vunpack.c.h.b16 %v802
    %v1402 = vunpack.c.l.b16 %v803
    %v1403 = vunpack.c.h.b16 %v803
    %v1404 = vunpack.c.l.b16 %v804
    %v1405 = vunpack.c.h.b16 %v804
    %v1406 = vunpack.c.l.b16 %v805
    %v1407 = vunpack.c.h.b16 %v805
    %v1408 = vunpack.c.l.b16 %v806
    %v1409 = vunpack.c.h.b16 %v806
    %v1410 = vunpack.c.l.b16 %v807
    %v1411 = vunpack.c.h.b16 %v807
    %v1412 = vunpack.c.l.b16 %v808
    %v1413 = vunpack.c.h.b16 %v808
    %v1414 = vunpack.c.l.b16 %v809
    %v1415 = vunpack.c.h.b16 %v809
    %v1416 = vunpack.c.l.b16 %v810
    %v1417 = vunpack.c.h.b16 %v810
    %v1418 = vunpack.c.l.b16 %v811
    %v1419 = vunpack.c.h.b16 %v811
    %v1420 = vunpack.c.l.b16 %v812
    %v1421 = vunpack.c.h.b16 %v812
    %v1422 = vunpack.c.l.b16 %v813
    %v1423 = vunpack.c.h.b16 %v813
    %v1424 = vunpack.c.l.b16 %v814
    %v1425 = vunpack.c.h.b16 %v814
    %v1426 = vunpack.c.l.b16 %v815
    %v1427 = vunpack.c.h.b16 %v815
    %v1428 = vunpack.c.l.b16 %v816
    %v1429 = vunpack.c.h.b16 %v816
    %v1430 = vunpack.c.l.b16 %v817
    %v1431 = vunpack.c.h.b16 %v817
    %v1432 = vunpack.c.l.b16 %v818
    %v1433 = vunpack.c.h.b16 %v818
    %v1434 = vunpack.c.l.b16 %v819
    %v1435 = vunpack.c.h.b16 %v819
    %v1436 = vunpack.c.l.b16 %v820
    %v1437 = vunpack.c.h.b16 %v820
    %v1438 = vunpack.c.l.b16 %v821
    %v1439 = vunpack.c.h.b16 %v821
    %v1440 = vunpack.c.l.b16 %v822
    %v1441 = vunpack.c.h.b16 %v822
    %v1442 = vunpack.c.l.b16 %v823
    %v1443 = vunpack.c.h.b16 %v823
    %v1444 = vunpack.c.l.b16 %v824
    %v1445 = vunpack.c.h.b16 %v824
    %v1446 = vunpack.c.l.b16 %v825
    %v1447 = vunpack.c.h.b16 %v825
    %v1448 = vunpack.c.l.b16 %v826
    %v1449 = vunpack.c.h.b16 %v826
    %v1450 = vunpack.c.l.b16 %v827
    %v1451 = vunpack.c.h.b16 %v827
    %v1452 = vunpack.c.l.b16 %v828
    %v1453 = vunpack.c.h.b16 %v828
    %v1454 = vunpack.c.l.b16 %v829
    %v1455 = vunpack.c.h.b16 %v829
    %v1456 = vunpack.c.l.b16 %v830
    %v1457 = vunpack.c.h.b16 %v830
    %v1458 = vunpack.c.l.b16 %v831
    %v1459 = vunpack.c.h.b16 %v831
    %v1460 = vunpack.c.l.b16 %v832
    %v1461 = vunpack.c.h.b16 %v832
    %v1462 = vunpack.c.l.b16 %v833
    %v1463 = vunpack.c.h.b16 %v833
    %v1464 = vunpack.c.l.b16 %v834
    %v1465 = vunpack.c.h.b16 %v834
    %v1466 = vunpack.c.l.b16 %v835
    %v1467 = vunpack.c.h.b16 %v835
    %v1468 = vunpack.c.l.b16 %v836
    %v1469 = vunpack.c.h.b16 %v836
    %v1470 = vunpack.c.l.b16 %v837
    %v1471 = vunpack.c.h.b16 %v837
    %v1472 = vunpack.c.l.b16 %v838
    %v1473 = vunpack.c.h.b16 %v838
    %v1474 = vunpack.c.l.b16 %v839
    %v1475 = vunpack.c.h.b16 %v839
    %v1476 = vunpack.c.l.b16 %v840
    %v1477 = vunpack.c.h.b16 %v840
    %v1478 = vunpack.c.l.b16 %v841
    %v1479 = vunpack.c.h.b16 %v841
    %v1480 = vunpack.c.l.b16 %v842
    %v1481 = vunpack.c.h.b16 %v842
    %v1482 = vunpack.c.l.b16 %v843
    %v1483 = vunpack.c.h.b16 %v843
    %v1484 = vunpack.c.l.b16 %v844
    %v1485 = vunpack.c.h.b16 %v844
    %v1486 = vunpack.c.l.b16 %v845
    %v1487 = vunpack.c.h.b16 %v845
    %v1488 = vunpack.c.l.b16 %v846
    %v1489 = vunpack.c.h.b16 %v846
    %v1490 = vunpack.c.l.b16 %v847
    %v1491 = vunpack.c.h.b16 %v847
    %v1492 = vunpack.c.l.b16 %v848
    %v1493 = vunpack.c.h.b16 %v848
    %v1494 = vunpack.c.l.b16 %v849
    %v1495 = vunpack.c.h.b16 %v849
    %v1496 = vunpack.c.l.b16 %v850
    %v1497 = vunpack.c.h.b16 %v850
    %v1498 = vunpack.c.l.b16 %v851
    %v1499 = vunpack.c.h.b16 %v851
    %v1500 = vunpack.c.l.b16 %v852
    %v1501 = vunpack.c.h.b16 %v852
    %v1502 = vunpack.c.l.b16 %v853
    %v1503 = vunpack.c.h.b16 %v853
    %v1504 = vunpack.c.l.b16 %v854
    %v1505 = vunpack.c.h.b16 %v854
    %v1506 = vunpack.c.l.b16 %v855
    %v1507 = vunpack.c.h.b16 %v855
    %v1508 = vunpack.c.l.b16 %v856
    %v1509 = vunpack.c.h.b16 %v856
    %v1510 = vunpack.c.l.b16 %v857
    %v1511 = vunpack.c.h.b16 %v857
    %v1512 = vunpack.c.l.b16 %v858
    %v1513 = vunpack.c.h.b16 %v858
    %v1514 = vunpack.c.l.b16 %v859
    %v1515 = vunpack.c.h.b16 %v859
    %v1516 = vunpack.c.l.b16 %v860
    %v1517 = vunpack.c.h.b16 %v860
    %v1518 = vunpack.c.l.b16 %v861
    %v1519 = vunpack.c.h.b16 %v861
    %v1520 = vunpack.c.l.b16 %v862
    %v1521 = vunpack.c.h.b16 %v862
    %v1522 = vunpack.c.l.b16 %v863
    %v1523 = vunpack.c.h.b16 %v863
    %v1524 = vunpack.c.l.b16 %v864
    %v1525 = vunpack.c.h.b16 %v864
    %v1526 = vunpack.c.l.b16 %v865
    %v1527 = vunpack.c.h.b16 %v865
    %v1528 = vunpack.c.l.b16 %v866
    %v1529 = vunpack.c.h.b16 %v866
    %v1530 = vunpack.c.l.b16 %v867
    %v1531 = vunpack.c.h.b16 %v867
    %v1532 = vunpack.c.l.b16 %v868
    %v1533 = vunpack.c.h.b16 %v868
    %v1534 = vunpack.c.l.b16 %v869
    %v1535 = vunpack.c.h.b16 %v869
    %v1536 = vunpack.c.l.b16 %v870
    %v1537 = vunpack.c.h.b16 %v870
    %v1538 = vunpack.c.l.b16 %v871
    %v1539 = vunpack.c.h.b16 %v871
    %v1540 = vunpack.c.l.b16 %v872
    %v1541 = vunpack.c.h.b16 %v872
    %v1542 = vunpack.c.l.b16 %v873
    %v1543 = vunpack.c.h.b16 %v873
    %v1544 = vunpack.c.l.b16 %v874
    %v1545 = vunpack.c.h.b16 %v874
    %v1546 = vunpack.c.l.b16 %v875
    %v1547 = vunpack.c.h.b16 %v875
    %v1548 = vunpack.c.l.b16 %v876
    %v1549 = vunpack.c.h.b16 %v876
    %v1550 = vunpack.c.l.b16 %v877
    %v1551 = vunpack.c.h.b16 %v877
    %v1552 = vunpack.c.l.b16 %v878
    %v1553 = vunpack.c.h.b16 %v878
    %v1554 = vunpack.c.l.b16 %v879
    %v1555 = vunpack.c.h.b16 %v879
    %v1556 = vunpack.c.l.b16 %v880
    %v1557 = vunpack.c.h.b16 %v880
    %v1558 = vunpack.c.l.b16 %v881
    %v1559 = vunpack.c.h.b16 %v881
    %v1560 = vunpack.c.l.b16 %v882
    %v1561 = vunpack.c.h.b16 %v882
    %v1562 = vunpack.c.l.b16 %v883
    %v1563 = vunpack.c.h.b16 %v883
    %v1564 = vunpack.c.l.b16 %v884
    %v1565 = vunpack.c.h.b16 %v884
    %v1566 = vunpack.c.l.b16 %v885
    %v1567 = vunpack.c.h.b16 %v885
    %v1568 = vunpack.c.l.b16 %v886
    %v1569 = vunpack.c.h.b16 %v886
    %v1570 = vunpack.c.l.b16 %v887
    %v1571 = vunpack.c.h.b16 %v887
    %v1572 = vunpack.c.l.b16 %v888
    %v1573 = vunpack.c.h.b16 %v888
    %v1574 = vunpack.c.l.b16 %v889
    %v1575 = vunpack.c.h.b16 %v889
    %v1576 = vunpack.c.l.b16 %v890
    %v1577 = vunpack.c.h.b16 %v890
    %v1578 = vunpack.c.l.b16 %v891
    %v1579 = vunpack.c.h.b16 %v891
    %v1580 = vunpack.c.l.b16 %v892
    %v1581 = vunpack.c.h.b16 %v892
    %v1582 = vunpack.c.l.b16 %v893
    %v1583 = vunpack.c.h.b16 %v893
    %v1584 = vunpack.c.l.b16 %v894
    %v1585 = vunpack.c.h.b16 %v894
    %v1586 = vunpack.c.l.b16 %v895
    %v1587 = vunpack.c.h.b16 %v895
    %v1588 = vunpack.c.l.b16 %v896
    %v1589 = vunpack.c.h.b16 %v896
    %v1590 = vunpack.c.l.b16 %v897
    %v1591 = vunpack.c.h.b16 %v897
    %v1592 = vunpack.c.l.b16 %v898
    %v1593 = vunpack.c.h.b16 %v898
    %v1594 = vunpack.c.l.b16 %v899
    %v1595 = vunpack.c.h.b16 %v899
    %v1596 = vunpack.c.l.b16 %v900
    %v1597 = vunpack.c.h.b16 %v900
    %v1598 = vunpack.c.l.b16 %v901
    %v1599 = vunpack.c.h.b16 %v901
    %v1600 = vunpack.c.l.b16 %v902
    %v1601 = vunpack.c.h.b16 %v902
    %v1602 = vunpack.c.l.b16 %v903
    %v1603 = vunpack.c.h.b16 %v903
    %v1604 = vunpack.c.l.b16 %v904
    %v1605 = vunpack.c.h.b16 %v904
    %v1606 = vunpack.c.l.b16 %v905
    %v1607 = vunpack.c.h.b16 %v905
    %v1608 = vunpack.c.l.b16 %v906
    %v1609 = vunpack.c.h.b16 %v906
    %v1610 = vunpack.c.l.b16 %v907
    %v1611 = vunpack.c.h.b16 %v907
    %v1612 = vunpack.c.l.b16 %v908
    %v1613 = vunpack.c.h.b16 %v908
    %v1614 = vunpack.c.l.b16 %v909
    %v1615 = vunpack.c.h.b16 %v909
    %v1616 = vunpack.c.l.b16 %v910
    %v1617 = vunpack.c.h.b16 %v910
    %v1618 = vunpack.c.l.b16 %v911
    %v1619 = vunpack.c.h.b16 %v911
    %v1620 = vunpack.c.l.b16 %v912
    %v1621 = vunpack.c.h.b16 %v912
    %v1622 = vunpack.c.l.b16 %v913
    %v1623 = vunpack.c.h.b16 %v913
    %v1624 = vunpack.c.l.b16 %v914
    %v1625 = vunpack.c.h.b16 %v914
    %v1626 = vunpack.c.l.b16 %v915
    %v1627 = vunpack.c.h.b16 %v915
    %v1628 = vunpack.c.l.b16 %v916
    %v1629 = vunpack.c.h.b16 %v916
    %v1630 = vunpack.c.l.b16 %v917
    %v1631 = vunpack.c.h.b16 %v917
    %v1632 = vunpack.c.l.b16 %v918
    %v1633 = vunpack.c.h.b16 %v918
    %v1634 = vunpack.c.l.b16 %v919
    %v1635 = vunpack.c.h.b16 %v919
    %v1636 = vunpack.c.l.b16 %v920
    %v1637 = vunpack.c.h.b16 %v920
    %v1638 = vunpack.c.l.b16 %v921
    %v1639 = vunpack.c.h.b16 %v921
    %v1640 = vunpack.c.l.b16 %v922
    %v1641 = vunpack.c.h.b16 %v922
    %v1642 = vunpack.c.l.b16 %v923
    %v1643 = vunpack.c.h.b16 %v923
    %v1644 = vunpack.c.l.b16 %v924
    %v1645 = vunpack.c.h.b16 %v924
    %v1646 = vunpack.c.l.b16 %v925
    %v1647 = vunpack.c.h.b16 %v925
    %v1648 = vunpack.c.l.b16 %v926
    %v1649 = vunpack.c.h.b16 %v926
    %v1650 = vunpack.c.l.b16 %v927
    %v1651 = vunpack.c.h.b16 %v927
    %v1652 = vunpack.c.l.b16 %v928
    %v1653 = vunpack.c.h.b16 %v928
    %v1654 = vunpack.c.l.b16 %v929
    %v1655 = vunpack.c.h.b16 %v929
    %v1656 = vunpack.c.l.b16 %v930
    %v1657 = vunpack.c.h.b16 %v930
    %v1658 = vunpack.c.l.b16 %v931
    %v1659 = vunpack.c.h.b16 %v931
    %v1660 = vunpack.c.l.b16 %v932
    %v1661 = vunpack.c.h.b16 %v932
    %v1662 = vunpack.c.l.b16 %v933
    %v1663 = vunpack.c.h.b16 %v933
    %v1664 = vunpack.c.l.b16 %v934
    %v1665 = vunpack.c.h.b16 %v934
    %v1666 = vunpack.c.l.b16 %v935
    %v1667 = vunpack.c.h.b16 %v935
    %v1668 = vunpack.c.l.b16 %v936
    %v1669 = vunpack.c.h.b16 %v936
    %v1670 = vunpack.c.l.b16 %v937
    %v1671 = vunpack.c.h.b16 %v937
    %v1672 = vunpack.c.l.b16 %v938
    %v1673 = vunpack.c.h.b16 %v938
    %v1674 = vunpack.c.l.b16 %v939
    %v1675 = vunpack.c.h.b16 %v939
    %v1676 = vunpack.c.l.b16 %v940
    %v1677 = vunpack.c.h.b16 %v940
    %v1678 = vunpack.c.l.b16 %v941
    %v1679 = vunpack.c.h.b16 %v941
    %v1680 = vunpack.c.l.b16 %v942
    %v1681 = vunpack.c.h.b16 %v942
    %v1682 = vunpack.c.l.b16 %v943
    %v1683 = vunpack.c.h.b16 %v943
    %v1684 = vunpack.c.l.b16 %v944
    %v1685 = vunpack.c.h.b16 %v944
    %v1686 = vunpack.c.l.b16 %v945
    %v1687 = vunpack.c.h.b16 %v945
    %v1688 = vunpack.c.l.b16 %v946
    %v1689 = vunpack.c.h.b16 %v946
    %v1690 = vunpack.c.l.b16 %v947
    %v1691 = vunpack.c.h.b16 %v947
    %v1692 = vunpack.c.l.b16 %v948
    %v1693 = vunpack.c.h.b16 %v948
    %v1694 = vunpack.c.l.b16 %v949
    %v1695 = vunpack.c.h.b16 %v949
    %v1696 = vunpack.c.l.b16 %v950
    %v1697 = vunpack.c.h.b16 %v950
    %v1698 = vunpack.c.l.b16 %v951
    %v1699 = vunpack.c.h.b16 %v951
    %v1700 = vunpack.c.l.b16 %v952
    %v1701 = vunpack.c.h.b16 %v952
    %v1702 = vunpack.c.l.b16 %v953
    %v1703 = vunpack.c.h.b16 %v953
    %v1704 = vunpack.c.l.b16 %v954
    %v1705 = vunpack.c.h.b16 %v954
    %v1706 = vunpack.c.l.b16 %v955
    %v1707 = vunpack.c.h.b16 %v955
    %v1708 = vunpack.c.l.b16 %v956
    %v1709 = vunpack.c.h.b16 %v956
    %v1710 = vunpack.c.l.b16 %v957
    %v1711 = vunpack.c.h.b16 %v957
    %v1712 = vunpack.c.l.b16 %v958
    %v1713 = vunpack.c.h.b16 %v958
    %v1714 = vunpack.c.l.b16 %v959
    %v1715 = vunpack.c.h.b16 %v959
    %v1716 = vunpack.c.l.b16 %v960
    %v1717 = vunpack.c.h.b16 %v960
    %v1718 = vunpack.c.l.b16 %v961
    %v1719 = vunpack.c.h.b16 %v961
    %v1720 = vunpack.c.l.b16 %v962
    %v1721 = vunpack.c.h.b16 %v962
    %v1722 = vunpack.c.l.b16 %v963
    %v1723 = vunpack.c.h.b16 %v963
    %v1724 = vunpack.c.l.b16 %v964
    %v1725 = vunpack.c.h.b16 %v964
    %v1726 = vunpack.c.l.b16 %v965
    %v1727 = vunpack.c.h.b16 %v965
    %v1728 = vunpack.c.l.b16 %v966
    %v1729 = vunpack.c.h.b16 %v966
    %v1730 = vunpack.c.l.b16 %v967
    %v1731 = vunpack.c.h.b16 %v967
    %v1732 = vunpack.c.l.b16 %v968
    %v1733 = vunpack.c.h.b16 %v968
    %v1734 = vunpack.c.l.b16 %v969
    %v1735 = vunpack.c.h.b16 %v969
    %v1736 = vunpack.c.l.b16 %v970
    %v1737 = vunpack.c.h.b16 %v970
    %v1738 = vunpack.c.l.b16 %v971
    %v1739 = vunpack.c.h.b16 %v971
    %v1740 = vunpack.c.l.b16 %v972
    %v1741 = vunpack.c.h.b16 %v972
    %v1742 = vunpack.c.l.b16 %v973
    %v1743 = vunpack.c.h.b16 %v973
    %v1744 = vunpack.c.l.b16 %v974
    %v1745 = vunpack.c.h.b16 %v974
    %v1746 = vunpack.c.l.b16 %v975
    %v1747 = vunpack.c.h.b16 %v975
    %v1748 = vunpack.c.l.b16 %v976
    %v1749 = vunpack.c.h.b16 %v976
    %v1750 = vunpack.c.l.b16 %v977
    %v1751 = vunpack.c.h.b16 %v977
    %v1752 = vunpack.c.l.b16 %v978
    %v1753 = vunpack.c.h.b16 %v978
    %v1754 = vunpack.c.l.b16 %v979
    %v1755 = vunpack.c.h.b16 %v979
    %v1756 = vunpack.c.l.b16 %v980
    %v1757 = vunpack.c.h.b16 %v980
    %v1758 = vunpack.c.l.b16 %v981
    %v1759 = vunpack.c.h.b16 %v981
    %v1760 = vunpack.c.l.b16 %v982
    %v1761 = vunpack.c.h.b16 %v982
    %v1762 = vunpack.c.l.b16 %v983
    %v1763 = vunpack.c.h.b16 %v983
    %v1764 = vunpack.c.l.b16 %v984
    %v1765 = vunpack.c.h.b16 %v984
    %v1766 = vunpack.c.l.b16 %v985
    %v1767 = vunpack.c.h.b16 %v985
    %v1768 = vunpack.c.l.b16 %v986
    %v1769 = vunpack.c.h.b16 %v986
    %v1770 = vunpack.c.l.b16 %v987
    %v1771 = vunpack.c.h.b16 %v987
    %v1772 = vunpack.c.l.b16 %v988
    %v1773 = vunpack.c.h.b16 %v988
    %v1774 = vunpack.c.l.b16 %v989
    %v1775 = vunpack.c.h.b16 %v989
    %v1776 = vunpack.c.l.b16 %v990
    %v1777 = vunpack.c.h.b16 %v990
    %v1778 = vunpack.c.l.b16 %v991
    %v1779 = vunpack.c.h.b16 %v991
    %v1780 = vunpack.c.l.b16 %v992
    %v1781 = vunpack.c.h.b16 %v992
    %v1782 = vunpack.c.l.b16 %v993
    %v1783 = vunpack.c.h.b16 %v993
    %v1784 = vpack.c.b16 %v1276, %v1272
    %v1785 = vpack.c.b16 %v1277, %v1273
    %v1786 = vpack.c.b16 %v1278, %v1274
    %v1787 = vpack.c.b16 %v1279, %v1275
    %v1788 = vpack.c.b16 %v1284, %v1280
    %v1789 = vpack.c.b16 %v1285, %v1281
    %v1790 = vpack.c.b16 %v1286, %v1282
    %v1791 = vpack.c.b16 %v1287, %v1283
    %v1792 = vpack.c.b16 %v1292, %v1288
    %v1793 = vpack.c.b16 %v1293, %v1289
    %v1794 = vpack.c.b16 %v1294, %v1290
    %v1795 = vpack.c.b16 %v1295, %v1291
    %v1796 = vpack.c.b16 %v1300, %v1296
    %v1797 = vpack.c.b16 %v1301, %v1297
    %v1798 = vpack.c.b16 %v1302, %v1298
    %v1799 = vpack.c.b16 %v1303, %v1299
    %v1800 = vpack.c.b16 %v1308, %v1304
    %v1801 = vpack.c.b16 %v1309, %v1305
    %v1802 = vpack.c.b16 %v1310, %v1306
    %v1803 = vpack.c.b16 %v1311, %v1307
    %v1804 = vpack.c.b16 %v1316, %v1312
    %v1805 = vpack.c.b16 %v1317, %v1313
    %v1806 = vpack.c.b16 %v1318, %v1314
    %v1807 = vpack.c.b16 %v1319, %v1315
    %v1808 = vpack.c.b16 %v1324, %v1320
    %v1809 = vpack.c.b16 %v1325, %v1321
    %v1810 = vpack.c.b16 %v1326, %v1322
    %v1811 = vpack.c.b16 %v1327, %v1323
    %v1812 = vpack.c.b16 %v1332, %v1328
    %v1813 = vpack.c.b16 %v1333, %v1329
    %v1814 = vpack.c.b16 %v1334, %v1330
    %v1815 = vpack.c.b16 %v1335, %v1331
    %v1816 = vpack.c.b16 %v1340, %v1336
    %v1817 = vpack.c.b16 %v1341, %v1337
    %v1818 = vpack.c.b16 %v1342, %v1338
    %v1819 = vpack.c.b16 %v1343, %v1339
    %v1820 = vpack.c.b16 %v1348, %v1344
    %v1821 = vpack.c.b16 %v1349, %v1345
    %v1822 = vpack.c.b16 %v1350, %v1346
    %v1823 = vpack.c.b16 %v1351, %v1347
    %v1824 = vpack.c.b16 %v1356, %v1352
    %v1825 = vpack.c.b16 %v1357, %v1353
    %v1826 = vpack.c.b16 %v1358, %v1354
    %v1827 = vpack.c.b16 %v1359, %v1355
    %v1828 = vpack.c.b16 %v1364, %v1360
    %v1829 = vpack.c.b16 %v1365, %v1361
    %v1830 = vpack.c.b16 %v1366, %v1362
    %v1831 = vpack.c.b16 %v1367, %v1363
    %v1832 = vpack.c.b16 %v1372, %v1368
    %v1833 = vpack.c.b16 %v1373, %v1369
    %v1834 = vpack.c.b16 %v1374, %v1370
    %v1835 = vpack.c.b16 %v1375, %v1371
    %v1836 = vpack.c.b16 %v1380, %v1376
    %v1837 = vpack.c.b16 %v1381, %v1377
    %v1838 = vpack.c.b16 %v1382, %v1378
    %v1839 = vpack.c.b16 %v1383, %v1379
    %v1840 = vpack.c.b16 %v1388, %v1384
    %v1841 = vpack.c.b16 %v1389, %v1385
    %v1842 = vpack.c.b16 %v1390, %v1386
    %v1843 = vpack.c.b16 %v1391, %v1387
    %v1844 = vpack.c.b16 %v1396, %v1392
    %v1845 = vpack.c.b16 %v1397, %v1393
    %v1846 = vpack.c.b16 %v1398, %v1394
    %v1847 = vpack.c.b16 %v1399, %v1395
    %v1848 = vpack.c.b16 %v1404, %v1400
    %v1849 = vpack.c.b16 %v1405, %v1401
    %v1850 = vpack.c.b16 %v1406, %v1402
    %v1851 = vpack.c.b16 %v1407, %v1403
    %v1852 = vpack.c.b16 %v1412, %v1408
    %v1853 = vpack.c.b16 %v1413, %v1409
    %v1854 = vpack.c.b16 %v1414, %v1410
    %v1855 = vpack.c.b16 %v1415, %v1411
    %v1856 = vpack.c.b16 %v1420, %v1416
    %v1857 = vpack.c.b16 %v1421, %v1417
    %v1858 = vpack.c.b16 %v1422, %v1418
    %v1859 = vpack.c.b16 %v1423, %v1419
    %v1860 = vpack.c.b16 %v1428, %v1424
    %v1861 = vpack.c.b16 %v1429, %v1425
    %v1862 = vpack.c.b16 %v1430, %v1426
    %v1863 = vpack.c.b16 %v1431, %v1427
    %v1864 = vpack.c.b16 %v1436, %v1432
    %v1865 = vpack.c.b16 %v1437, %v1433
    %v1866 = vpack.c.b16 %v1438, %v1434
    %v1867 = vpack.c.b16 %v1439, %v1435
    %v1868 = vpack.c.b16 %v1444, %v1440
    %v1869 = vpack.c.b16 %v1445, %v1441
    %v1870 = vpack.c.b16 %v1446, %v1442
    %v1871 = vpack.c.b16 %v1447, %v1443
    %v1872 = vpack.c.b16 %v1452, %v1448
    %v1873 = vpack.c.b16 %v1453, %v1449
    %v1874 = vpack.c.b16 %v1454, %v1450
    %v1875 = vpack.c.b16 %v1455, %v1451
    %v1876 = vpack.c.b16 %v1460, %v1456
    %v1877 = vpack.c.b16 %v1461, %v1457
    %v1878 = vpack.c.b16 %v1462, %v1458
    %v1879 = vpack.c.b16 %v1463, %v1459
    %v1880 = vpack.c.b16 %v1468, %v1464
    %v1881 = vpack.c.b16 %v1469, %v1465
    %v1882 = vpack.c.b16 %v1470, %v1466
    %v1883 = vpack.c.b16 %v1471, %v1467
    %v1884 = vpack.c.b16 %v1476, %v1472
    %v1885 = vpack.c.b16 %v1477, %v1473
    %v1886 = vpack.c.b16 %v1478, %v1474
    %v1887 = vpack.c.b16 %v1479, %v1475
    %v1888 = vpack.c.b16 %v1484, %v1480
    %v1889 = vpack.c.b16 %v1485, %v1481
    %v1890 = vpack.c.b16 %v1486, %v1482
    %v1891 = vpack.c.b16 %v1487, %v1483
    %v1892 = vpack.c.b16 %v1492, %v1488
    %v1893 = vpack.c.b16 %v1493, %v1489
    %v1894 = vpack.c.b16 %v1494, %v1490
    %v1895 = vpack.c.b16 %v1495, %v1491
    %v1896 = vpack.c.b16 %v1500, %v1496
    %v1897 = vpack.c.b16 %v1501, %v1497
    %v1898 = vpack.c.b16 %v1502, %v1498
    %v1899 = vpack.c.b16 %v1503, %v1499
    %v1900 = vpack.c.b16 %v1508, %v1504
    %v1901 = vpack.c.b16 %v1509, %v1505
    %v1902 = vpack.c.b16 %v1510, %v1506
    %v1903 = vpack.c.b16 %v1511, %v1507
    %v1904 = vpack.c.b16 %v1516, %v1512
    %v1905 = vpack.c.b16 %v1517, %v1513
    %v1906 = vpack.c.b16 %v1518, %v1514
    %v1907 = vpack.c.b16 %v1519, %v1515
    %v1908 = vpack.c.b16 %v1524, %v1520
    %v1909 = vpack.c.b16 %v1525, %v1521
    %v1910 = vpack.c.b16 %v1526, %v1522
    %v1911 = vpack.c.b16 %v1527, %v1523
    %v1912 = vpack.c.b16 %v1532, %v1528
    %v1913 = vpack.c.b16 %v1533, %v1529
    %v1914 = vpack.c.b16 %v1534, %v1530
    %v1915 = vpack.c.b16 %v1535, %v1531
    %v1916 = vpack.c.b16 %v1540, %v1536
    %v1917 = vpack.c.b16 %v1541, %v1537
    %v1918 = vpack.c.b16 %v1542, %v1538
    %v1919 = vpack.c.b16 %v1543, %v1539
    %v1920 = vpack.c.b16 %v1548, %v1544
    %v1921 = vpack.c.b16 %v1549, %v1545
    %v1922 = vpack.c.b16 %v1550, %v1546
    %v1923 = vpack.c.b16 %v1551, %v1547
    %v1924 = vpack.c.b16 %v1556, %v1552
    %v1925 = vpack.c.b16 %v1557, %v1553
    %v1926 = vpack.c.b16 %v1558, %v1554
    %v1927 = vpack.c.b16 %v1559, %v1555
    %v1928 = vpack.c.b16 %v1564, %v1560
    %v1929 = vpack.c.b16 %v1565, %v1561
    %v1930 = vpack.c.b16 %v1566, %v1562
    %v1931 = vpack.c.b16 %v1567, %v1563
    %v1932 = vpack.c.b16 %v1572, %v1568
    %v1933 = vpack.c.b16 %v1573, %v1569
    %v1934 = vpack.c.b16 %v1574, %v1570
    %v1935 = vpack.c.b16 %v1575, %v1571
    %v1936 = vpack.c.b16 %v1580, %v1576
    %v1937 = vpack.c.b16 %v1581, %v1577
    %v1938 = vpack.c.b16 %v1582, %v1578
    %v1939 = vpack.c.b16 %v1583, %v1579
    %v1940 = vpack.c.b16 %v1588, %v1584
    %v1941 = vpack.c.b16 %v1589, %v1585
    %v1942 = vpack.c.b16 %v1590, %v1586
    %v1943 = vpack.c.b16 %v1591, %v1587
    %v1944 = vpack.c.b16 %v1596, %v1592
    %v1945 = vpack.c.b16 %v1597, %v1593
    %v1946 = vpack.c.b16 %v1598, %v1594
    %v1947 = vpack.c.b16 %v1599, %v1595
    %v1948 = vpack.c.b16 %v1604, %v1600
    %v1949 = vpack.c.b16 %v1605, %v1601
    %v1950 = vpack.c.b16 %v1606, %v1602
    %v1951 = vpack.c.b16 %v1607, %v1603
    %v1952 = vpack.c.b16 %v1612, %v1608
    %v1953 = vpack.c.b16 %v1613, %v1609
    %v1954 = vpack.c.b16 %v1614, %v1610
    %v1955 = vpack.c.b16 %v1615, %v1611
    %v1956 = vpack.c.b16 %v1620, %v1616
    %v1957 = vpack.c.b16 %v1621, %v1617
    %v1958 = vpack.c.b16 %v1622, %v1618
    %v1959 = vpack.c.b16 %v1623, %v1619
    %v1960 = vpack.c.b16 %v1628, %v1624
    %v1961 = vpack.c.b16 %v1629, %v1625
    %v1962 = vpack.c.b16 %v1630, %v1626
    %v1963 = vpack.c.b16 %v1631, %v1627
    %v1964 = vpack.c.b16 %v1636, %v1632
    %v1965 = vpack.c.b16 %v1637, %v1633
    %v1966 = vpack.c.b16 %v1638, %v1634
    %v1967 = vpack.c.b16 %v1639, %v1635
    %v1968 = vpack.c.b16 %v1644, %v1640
    %v1969 = vpack.c.b16 %v1645, %v1641
    %v1970 = vpack.c.b16 %v1646, %v1642
    %v1971 = vpack.c.b16 %v1647, %v1643
    %v1972 = vpack.c.b16 %v1652, %v1648
    %v1973 = vpack.c.b16 %v1653, %v1649
    %v1974 = vpack.c.b16 %v1654, %v1650
    %v1975 = vpack.c.b16 %v1655, %v1651
    %v1976 = vpack.c.b16 %v1660, %v1656
    %v1977 = vpack.c.b16 %v1661, %v1657
    %v1978 = vpack.c.b16 %v1662, %v1658
    %v1979 = vpack.c.b16 %v1663, %v1659
    %v1980 = vpack.c.b16 %v1668, %v1664
    %v1981 = vpack.c.b16 %v1669, %v1665
    %v1982 = vpack.c.b16 %v1670, %v1666
    %v1983 = vpack.c.b16 %v1671, %v1667
    %v1984 = vpack.c.b16 %v1676, %v1672
    %v1985 = vpack.c.b16 %v1677, %v1673
    %v1986 = vpack.c.b16 %v1678, %v1674
    %v1987 = vpack.c.b16 %v1679, %v1675
    %v1988 = vpack.c.b16 %v1684, %v1680
    %v1989 = vpack.c.b16 %v1685, %v1681
    %v1990 = vpack.c.b16 %v1686, %v1682
    %v1991 = vpack.c.b16 %v1687, %v1683
    %v1992 = vpack.c.b16 %v1692, %v1688
    %v1993 = vpack.c.b16 %v1693, %v1689
    %v1994 = vpack.c.b16 %v1694, %v1690
    %v1995 = vpack.c.b16 %v1695, %v1691
    %v1996 = vpack.c.b16 %v1700, %v1696
    %v1997 = vpack.c.b16 %v1701, %v1697
    %v1998 = vpack.c.b16 %v1702, %v1698
    %v1999 = vpack.c.b16 %v1703, %v1699
    %v2000 = vpack.c.b16 %v1708, %v1704
    %v2001 = vpack.c.b16 %v1709, %v1705
    %v2002 = vpack.c.b16 %v1710, %v1706
    %v2003 = vpack.c.b16 %v1711, %v1707
    %v2004 = vpack.c.b16 %v1716, %v1712
    %v2005 = vpack.c.b16 %v1717, %v1713
    %v2006 = vpack.c.b16 %v1718, %v1714
    %v2007 = vpack.c.b16 %v1719, %v1715
    %v2008 = vpack.c.b16 %v1724, %v1720
    %v2009 = vpack.c.b16 %v1725, %v1721
    %v2010 = vpack.c.b16 %v1726, %v1722
    %v2011 = vpack.c.b16 %v1727, %v1723
    %v2012 = vpack.c.b16 %v1732, %v1728
    %v2013 = vpack.c.b16 %v1733, %v1729
    %v2014 = vpack.c.b16 %v1734, %v1730
    %v2015 = vpack.c.b16 %v1735, %v1731
    %v2016 = vpack.c.b16 %v1740, %v1736
    %v2017 = vpack.c.b16 %v1741, %v1737
    %v2018 = vpack.c.b16 %v1742, %v1738
    %v2019 = vpack.c.b16 %v1743, %v1739
    %v2020 = vpack.c.b16 %v1748, %v1744
    %v2021 = vpack.c.b16 %v1749, %v1745
    %v2022 = vpack.c.b16 %v1750, %v1746
    %v2023 = vpack.c.b16 %v1751, %v1747
    %v2024 = vpack.c.b16 %v1756, %v1752
    %v2025 = vpack.c.b16 %v1757, %v1753
    %v2026 = vpack.c.b16 %v1758, %v1754
    %v2027 = vpack.c.b16 %v1759, %v1755
    %v2028 = vpack.c.b16 %v1764, %v1760
    %v2029 = vpack.c.b16 %v1765, %v1761
    %v2030 = vpack.c.b16 %v1766, %v1762
    %v2031 = vpack.c.b16 %v1767, %v1763
    %v2032 = vpack.c.b16 %v1772, %v1768
    %v2033 = vpack.c.b16 %v1773, %v1769
    %v2034 = vpack.c.b16 %v1774, %v1770
    %v2035 = vpack.c.b16 %v1775, %v1771
    %v2036 = vpack.c.b16 %v1780, %v1776
    %v2037 = vpack.c.b16 %v1781, %v1777
    %v2038 = vpack.c.b16 %v1782, %v1778
    %v2039 = vpack.c.b16 %v1783, %v1779
    %2296 = vmatprep.subr.bf16.mxu0 %v1785
    %2297 = vmatpush1.bf16.msra.mxu0 %v1784
    %2298 = vmatprep.subr.bf16.mxu0 %v1789
    %2299 = vmatpush1.bf16.msra.mxu0 %v1788
    %2300 = vmatprep.subr.bf16.mxu0 %v1793
    %2301 = vmatpush1.bf16.msra.mxu0 %v1792
    %2302 = vmatprep.subr.bf16.mxu0 %v1797
    %2303 = vmatpush1.bf16.msra.mxu0 %v1796
    %2304 = vmatprep.subr.bf16.mxu0 %v1801
    %2305 = vmatpush1.bf16.msra.mxu0 %v1800
    %2306 = vmatprep.subr.bf16.mxu0 %v1805
    %2307 = vmatpush1.bf16.msra.mxu0 %v1804
    %2308 = vmatprep.subr.bf16.mxu0 %v1809
    %2309 = vmatpush1.bf16.msra.mxu0 %v1808
    %2310 = vmatprep.subr.bf16.mxu0 %v1813
    %2311 = vmatpush1.bf16.msra.mxu0 %v1812
    %2312 = vmatprep.subr.bf16.mxu0 %v1817
    %2313 = vmatpush1.bf16.msra.mxu0 %v1816
    %2314 = vmatprep.subr.bf16.mxu0 %v1821
    %2315 = vmatpush1.bf16.msra.mxu0 %v1820
    %2316 = vmatprep.subr.bf16.mxu0 %v1825
    %2317 = vmatpush1.bf16.msra.mxu0 %v1824
    %2318 = vmatprep.subr.bf16.mxu0 %v1829
    %2319 = vmatpush1.bf16.msra.mxu0 %v1828
    %2320 = vmatprep.subr.bf16.mxu0 %v1833
    %2321 = vmatpush1.bf16.msra.mxu0 %v1832
    %2322 = vmatprep.subr.bf16.mxu0 %v1837
    %2323 = vmatpush1.bf16.msra.mxu0 %v1836
    %2324 = vmatprep.subr.bf16.mxu0 %v1841
    %2325 = vmatpush1.bf16.msra.mxu0 %v1840
    %2326 = vmatprep.subr.bf16.mxu0 %v1845
    %2327 = vmatpush1.bf16.msra.mxu0 %v1844
    %2328 = vmatprep.mubr.bf16.mxu0 %v731
    %2329 = vmatmul.mubr.bf16.gmra.mrb[0].mxu0 %v730
    %v2330 = vpop.f32.mrb[0].mxu0
    %v2331 = vadd.f32 %v999, %v2330
    %v2332 = vpop.f32.mrb[0].mxu0
    %v2333 = vadd.f32 %v1003, %v2332
    %v2334 = vpop.f32.mrb[0].mxu0
    %v2335 = vadd.f32 %v999, %v2334
    %v2336 = vpop.f32.mrb[0].mxu0
    %v2337 = vadd.f32 %v1003, %v2336
    %2338 = vdwg.mxu0
    %2339 = vmatprep.subr.bf16.mxu0 %v1849
    %2340 = vmatpush1.bf16.msra.mxu0 %v1848
    %2341 = vmatprep.subr.bf16.mxu0 %v1853
    %2342 = vmatpush1.bf16.msra.mxu0 %v1852
    %2343 = vmatprep.subr.bf16.mxu0 %v1857
    %2344 = vmatpush1.bf16.msra.mxu0 %v1856
    %2345 = vmatprep.subr.bf16.mxu0 %v1861
    %2346 = vmatpush1.bf16.msra.mxu0 %v1860
    %2347 = vmatprep.subr.bf16.mxu0 %v1865
    %2348 = vmatpush1.bf16.msra.mxu0 %v1864
    %2349 = vmatprep.subr.bf16.mxu0 %v1869
    %2350 = vmatpush1.bf16.msra.mxu0 %v1868
    %2351 = vmatprep.subr.bf16.mxu0 %v1873
    %2352 = vmatpush1.bf16.msra.mxu0 %v1872
    %2353 = vmatprep.subr.bf16.mxu0 %v1877
    %2354 = vmatpush1.bf16.msra.mxu0 %v1876
    %2355 = vmatprep.subr.bf16.mxu0 %v1881
    %2356 = vmatpush1.bf16.msra.mxu0 %v1880
    %2357 = vmatprep.subr.bf16.mxu0 %v1885
    %2358 = vmatpush1.bf16.msra.mxu0 %v1884
    %2359 = vmatprep.subr.bf16.mxu0 %v1889
    %2360 = vmatpush1.bf16.msra.mxu0 %v1888
    %2361 = vmatprep.subr.bf16.mxu0 %v1893
    %2362 = vmatpush1.bf16.msra.mxu0 %v1892
    %2363 = vmatprep.subr.bf16.mxu0 %v1897
    %2364 = vmatpush1.bf16.msra.mxu0 %v1896
    %2365 = vmatprep.subr.bf16.mxu0 %v1901
    %2366 = vmatpush1.bf16.msra.mxu0 %v1900
    %2367 = vmatprep.subr.bf16.mxu0 %v1905
    %2368 = vmatpush1.bf16.msra.mxu0 %v1904
    %2369 = vmatprep.subr.bf16.mxu0 %v1909
    %2370 = vmatpush1.bf16.msra.mxu0 %v1908
    %2371 = vmatprep.mubr.bf16.mxu0 %v733
    %2372 = vmatmul.mubr.bf16.gmra.mrb[0].mxu0 %v732
    %v2373 = vpop.f32.mrb[0].mxu0
    %v2374 = vadd.f32 %v2331, %v2373
    %v2375 = vpop.f32.mrb[0].mxu0
    %v2376 = vadd.f32 %v2333, %v2375
    %v2377 = vpop.f32.mrb[0].mxu0
    %v2378 = vadd.f32 %v2335, %v2377
    %v2379 = vpop.f32.mrb[0].mxu0
    %v2380 = vadd.f32 %v2337, %v2379
    %2381 = vdwg.mxu0
    %2382 = vmatprep.subr.bf16.mxu0 %v1913
    %2383 = vmatpush1.bf16.msra.mxu0 %v1912
    %2384 = vmatprep.subr.bf16.mxu0 %v1917
    %2385 = vmatpush1.bf16.msra.mxu0 %v1916
    %2386 = vmatprep.subr.bf16.mxu0 %v1921
    %2387 = vmatpush1.bf16.msra.mxu0 %v1920
    %2388 = vmatprep.subr.bf16.mxu0 %v1925
    %2389 = vmatpush1.bf16.msra.mxu0 %v1924
    %2390 = vmatprep.subr.bf16.mxu0 %v1929
    %2391 = vmatpush1.bf16.msra.mxu0 %v1928
    %2392 = vmatprep.subr.bf16.mxu0 %v1933
    %2393 = vmatpush1.bf16.msra.mxu0 %v1932
    %2394 = vmatprep.subr.bf16.mxu0 %v1937
    %2395 = vmatpush1.bf16.msra.mxu0 %v1936
    %2396 = vmatprep.subr.bf16.mxu0 %v1941
    %2397 = vmatpush1.bf16.msra.mxu0 %v1940
    %2398 = vmatprep.subr.bf16.mxu0 %v1945
    %2399 = vmatpush1.bf16.msra.mxu0 %v1944
    %2400 = vmatprep.subr.bf16.mxu0 %v1949
    %2401 = vmatpush1.bf16.msra.mxu0 %v1948
    %2402 = vmatprep.subr.bf16.mxu0 %v1953
    %2403 = vmatpush1.bf16.msra.mxu0 %v1952
    %2404 = vmatprep.subr.bf16.mxu0 %v1957
    %2405 = vmatpush1.bf16.msra.mxu0 %v1956
    %2406 = vmatprep.subr.bf16.mxu0 %v1961
    %2407 = vmatpush1.bf16.msra.mxu0 %v1960
    %2408 = vmatprep.subr.bf16.mxu0 %v1965
    %2409 = vmatpush1.bf16.msra.mxu0 %v1964
    %2410 = vmatprep.subr.bf16.mxu0 %v1969
    %2411 = vmatpush1.bf16.msra.mxu0 %v1968
    %2412 = vmatprep.subr.bf16.mxu0 %v1973
    %2413 = vmatpush1.bf16.msra.mxu0 %v1972
    %2414 = vmatprep.mubr.bf16.mxu0 %v735
    %2415 = vmatmul.mubr.bf16.gmra.mrb[0].mxu0 %v734
    %v2416 = vpop.f32.mrb[0].mxu0
    %v2417 = vadd.f32 %v2374, %v2416
    %v2418 = vpop.f32.mrb[0].mxu0
    %v2419 = vadd.f32 %v2376, %v2418
    %v2420 = vpop.f32.mrb[0].mxu0
    %v2421 = vadd.f32 %v2378, %v2420
    %v2422 = vpop.f32.mrb[0].mxu0
    %v2423 = vadd.f32 %v2380, %v2422
    %2424 = vdwg.mxu0
    %2425 = vmatprep.subr.bf16.mxu0 %v1977
    %2426 = vmatpush1.bf16.msra.mxu0 %v1976
    %2427 = vmatprep.subr.bf16.mxu0 %v1981
    %2428 = vmatpush1.bf16.msra.mxu0 %v1980
    %2429 = vmatprep.subr.bf16.mxu0 %v1985
    %2430 = vmatpush1.bf16.msra.mxu0 %v1984
    %2431 = vmatprep.subr.bf16.mxu0 %v1989
    %2432 = vmatpush1.bf16.msra.mxu0 %v1988
    %2433 = vmatprep.subr.bf16.mxu0 %v1993
    %2434 = vmatpush1.bf16.msra.mxu0 %v1992
    %2435 = vmatprep.subr.bf16.mxu0 %v1997
    %2436 = vmatpush1.bf16.msra.mxu0 %v1996
    %2437 = vmatprep.subr.bf16.mxu0 %v2001
    %2438 = vmatpush1.bf16.msra.mxu0 %v2000
    %2439 = vmatprep.subr.bf16.mxu0 %v2005
    %2440 = vmatpush1.bf16.msra.mxu0 %v2004
    %2441 = vmatprep.subr.bf16.mxu0 %v2009
    %2442 = vmatpush1.bf16.msra.mxu0 %v2008
    %2443 = vmatprep.subr.bf16.mxu0 %v2013
    %2444 = vmatpush1.bf16.msra.mxu0 %v2012
    %2445 = vmatprep.subr.bf16.mxu0 %v2017
    %2446 = vmatpush1.bf16.msra.mxu0 %v2016
    %2447 = vmatprep.subr.bf16.mxu0 %v2021
    %2448 = vmatpush1.bf16.msra.mxu0 %v2020
    %2449 = vmatprep.subr.bf16.mxu0 %v2025
    %2450 = vmatpush1.bf16.msra.mxu0 %v2024
    %2451 = vmatprep.subr.bf16.mxu0 %v2029
    %2452 = vmatpush1.bf16.msra.mxu0 %v2028
    %2453 = vmatprep.subr.bf16.mxu0 %v2033
    %2454 = vmatpush1.bf16.msra.mxu0 %v2032
    %2455 = vmatprep.subr.bf16.mxu0 %v2037
    %2456 = vmatpush1.bf16.msra.mxu0 %v2036
    %2457 = vmatprep.mubr.bf16.mxu0 %v737
    %2458 = vmatmul.mubr.bf16.gmra.mrb[0].mxu0 %v736
    %v2459 = vpop.f32.mrb[0].mxu0
    %v2460 = vadd.f32 %v2417, %v2459
    %v2461 = vpop.f32.mrb[0].mxu0
    %v2462 = vadd.f32 %v2419, %v2461
    %v2463 = vpop.f32.mrb[0].mxu0
    %v2464 = vadd.f32 %v2421, %v2463
    %v2465 = vpop.f32.mrb[0].mxu0
    %v2466 = vadd.f32 %v2423, %v2465
    %2467 = vdwg.mxu0
    %2468 = vmatprep.subr.bf16.mxu0 %v1787
    %2469 = vmatpush1.bf16.msra.mxu0 %v1786
    %2470 = vmatprep.subr.bf16.mxu0 %v1791
    %2471 = vmatpush1.bf16.msra.mxu0 %v1790
    %2472 = vmatprep.subr.bf16.mxu0 %v1795
    %2473 = vmatpush1.bf16.msra.mxu0 %v1794
    %2474 = vmatprep.subr.bf16.mxu0 %v1799
    %2475 = vmatpush1.bf16.msra.mxu0 %v1798
    %2476 = vmatprep.subr.bf16.mxu0 %v1803
    %2477 = vmatpush1.bf16.msra.mxu0 %v1802
    %2478 = vmatprep.subr.bf16.mxu0 %v1807
    %2479 = vmatpush1.bf16.msra.mxu0 %v1806
    %2480 = vmatprep.subr.bf16.mxu0 %v1811
    %2481 = vmatpush1.bf16.msra.mxu0 %v1810
    %2482 = vmatprep.subr.bf16.mxu0 %v1815
    %2483 = vmatpush1.bf16.msra.mxu0 %v1814
    %2484 = vmatprep.subr.bf16.mxu0 %v1819
    %2485 = vmatpush1.bf16.msra.mxu0 %v1818
    %2486 = vmatprep.subr.bf16.mxu0 %v1823
    %2487 = vmatpush1.bf16.msra.mxu0 %v1822
    %2488 = vmatprep.subr.bf16.mxu0 %v1827
    %2489 = vmatpush1.bf16.msra.mxu0 %v1826
    %2490 = vmatprep.subr.bf16.mxu0 %v1831
    %2491 = vmatpush1.bf16.msra.mxu0 %v1830
    %2492 = vmatprep.subr.bf16.mxu0 %v1835
    %2493 = vmatpush1.bf16.msra.mxu0 %v1834
    %2494 = vmatprep.subr.bf16.mxu0 %v1839
    %2495 = vmatpush1.bf16.msra.mxu0 %v1838
    %2496 = vmatprep.subr.bf16.mxu0 %v1843
    %2497 = vmatpush1.bf16.msra.mxu0 %v1842
    %2498 = vmatprep.subr.bf16.mxu0 %v1847
    %2499 = vmatpush1.bf16.msra.mxu0 %v1846
    %2500 = vmatprep.mubr.bf16.mxu0 %v731
    %2501 = vmatmul.mubr.bf16.gmra.mrb[0].mxu0 %v730
    %v2502 = vpop.f32.mrb[0].mxu0
    %v2503 = vadd.f32 %v1007, %v2502
    %v2504 = vpop.f32.mrb[0].mxu0
    %v2505 = vadd.f32 %v1011, %v2504
    %v2506 = vpop.f32.mrb[0].mxu0
    %v2507 = vadd.f32 %v1007, %v2506
    %v2508 = vpop.f32.mrb[0].mxu0
    %v2509 = vadd.f32 %v1011, %v2508
    %2510 = vdwg.mxu0
    %2511 = vmatprep.subr.bf16.mxu0 %v1851
    %2512 = vmatpush1.bf16.msra.mxu0 %v1850
    %2513 = vmatprep.subr.bf16.mxu0 %v1855
    %2514 = vmatpush1.bf16.msra.mxu0 %v1854
    %2515 = vmatprep.subr.bf16.mxu0 %v1859
    %2516 = vmatpush1.bf16.msra.mxu0 %v1858
    %2517 = vmatprep.subr.bf16.mxu0 %v1863
    %2518 = vmatpush1.bf16.msra.mxu0 %v1862
    %2519 = vmatprep.subr.bf16.mxu0 %v1867
    %2520 = vmatpush1.bf16.msra.mxu0 %v1866
    %2521 = vmatprep.subr.bf16.mxu0 %v1871
    %2522 = vmatpush1.bf16.msra.mxu0 %v1870
    %2523 = vmatprep.subr.bf16.mxu0 %v1875
    %2524 = vmatpush1.bf16.msra.mxu0 %v1874
    %2525 = vmatprep.subr.bf16.mxu0 %v1879
    %2526 = vmatpush1.bf16.msra.mxu0 %v1878
    %2527 = vmatprep.subr.bf16.mxu0 %v1883
    %2528 = vmatpush1.bf16.msra.mxu0 %v1882
    %2529 = vmatprep.subr.bf16.mxu0 %v1887
    %2530 = vmatpush1.bf16.msra.mxu0 %v1886
    %2531 = vmatprep.subr.bf16.mxu0 %v1891
    %2532 = vmatpush1.bf16.msra.mxu0 %v1890
    %2533 = vmatprep.subr.bf16.mxu0 %v1895
    %2534 = vmatpush1.bf16.msra.mxu0 %v1894
    %2535 = vmatprep.subr.bf16.mxu0 %v1899
    %2536 = vmatpush1.bf16.msra.mxu0 %v1898
    %2537 = vmatprep.subr.bf16.mxu0 %v1903
    %2538 = vmatpush1.bf16.msra.mxu0 %v1902
    %2539 = vmatprep.subr.bf16.mxu0 %v1907
    %2540 = vmatpush1.bf16.msra.mxu0 %v1906
    %2541 = vmatprep.subr.bf16.mxu0 %v1911
    %2542 = vmatpush1.bf16.msra.mxu0 %v1910
    %2543 = vmatprep.mubr.bf16.mxu0 %v733
    %2544 = vmatmul.mubr.bf16.gmra.mrb[0].mxu0 %v732
    %v2545 = vpop.f32.mrb[0].mxu0
    %v2546 = vadd.f32 %v2503, %v2545
    %v2547 = vpop.f32.mrb[0].mxu0
    %v2548 = vadd.f32 %v2505, %v2547
    %v2549 = vpop.f32.mrb[0].mxu0
    %v2550 = vadd.f32 %v2507, %v2549
    %v2551 = vpop.f32.mrb[0].mxu0
    %v2552 = vadd.f32 %v2509, %v2551
    %2553 = vdwg.mxu0
    %2554 = vmatprep.subr.bf16.mxu0 %v1915
    %2555 = vmatpush1.bf16.msra.mxu0 %v1914
    %2556 = vmatprep.subr.bf16.mxu0 %v1919
    %2557 = vmatpush1.bf16.msra.mxu0 %v1918
    %2558 = vmatprep.subr.bf16.mxu0 %v1923
    %2559 = vmatpush1.bf16.msra.mxu0 %v1922
    %2560 = vmatprep.subr.bf16.mxu0 %v1927
    %2561 = vmatpush1.bf16.msra.mxu0 %v1926
    %2562 = vmatprep.subr.bf16.mxu0 %v1931
    %2563 = vmatpush1.bf16.msra.mxu0 %v1930
    %2564 = vmatprep.subr.bf16.mxu0 %v1935
    %2565 = vmatpush1.bf16.msra.mxu0 %v1934
    %2566 = vmatprep.subr.bf16.mxu0 %v1939
    %2567 = vmatpush1.bf16.msra.mxu0 %v1938
    %2568 = vmatprep.subr.bf16.mxu0 %v1943
    %2569 = vmatpush1.bf16.msra.mxu0 %v1942
    %2570 = vmatprep.subr.bf16.mxu0 %v1947
    %2571 = vmatpush1.bf16.msra.mxu0 %v1946
    %2572 = vmatprep.subr.bf16.mxu0 %v1951
    %2573 = vmatpush1.bf16.msra.mxu0 %v1950
    %2574 = vmatprep.subr.bf16.mxu0 %v1955
    %2575 = vmatpush1.bf16.msra.mxu0 %v1954
    %2576 = vmatprep.subr.bf16.mxu0 %v1959
    %2577 = vmatpush1.bf16.msra.mxu0 %v1958
    %2578 = vmatprep.subr.bf16.mxu0 %v1963
    %2579 = vmatpush1.bf16.msra.mxu0 %v1962
    %2580 = vmatprep.subr.bf16.mxu0 %v1967
    %2581 = vmatpush1.bf16.msra.mxu0 %v1966
    %2582 = vmatprep.subr.bf16.mxu0 %v1971
    %2583 = vmatpush1.bf16.msra.mxu0 %v1970
    %2584 = vmatprep.subr.bf16.mxu0 %v1975
    %2585 = vmatpush1.bf16.msra.mxu0 %v1974
    %2586 = vmatprep.mubr.bf16.mxu0 %v735
    %2587 = vmatmul.mubr.bf16.gmra.mrb[0].mxu0 %v734
    %v2588 = vpop.f32.mrb[0].mxu0
    %v2589 = vadd.f32 %v2546, %v2588
    %v2590 = vpop.f32.mrb[0].mxu0
    %v2591 = vadd.f32 %v2548, %v2590
    %v2592 = vpop.f32.mrb[0].mxu0
    %v2593 = vadd.f32 %v2550, %v2592
    %v2594 = vpop.f32.mrb[0].mxu0
    %v2595 = vadd.f32 %v2552, %v2594
    %2596 = vdwg.mxu0
    %2597 = vmatprep.subr.bf16.mxu0 %v1979
    %2598 = vmatpush1.bf16.msra.mxu0 %v1978
    %2599 = vmatprep.subr.bf16.mxu0 %v1983
    %2600 = vmatpush1.bf16.msra.mxu0 %v1982
    %2601 = vmatprep.subr.bf16.mxu0 %v1987
    %2602 = vmatpush1.bf16.msra.mxu0 %v1986
    %2603 = vmatprep.subr.bf16.mxu0 %v1991
    %2604 = vmatpush1.bf16.msra.mxu0 %v1990
    %2605 = vmatprep.subr.bf16.mxu0 %v1995
    %2606 = vmatpush1.bf16.msra.mxu0 %v1994
    %2607 = vmatprep.subr.bf16.mxu0 %v1999
    %2608 = vmatpush1.bf16.msra.mxu0 %v1998
    %2609 = vmatprep.subr.bf16.mxu0 %v2003
    %2610 = vmatpush1.bf16.msra.mxu0 %v2002
    %2611 = vmatprep.subr.bf16.mxu0 %v2007
    %2612 = vmatpush1.bf16.msra.mxu0 %v2006
    %2613 = vmatprep.subr.bf16.mxu0 %v2011
    %2614 = vmatpush1.bf16.msra.mxu0 %v2010
    %2615 = vmatprep.subr.bf16.mxu0 %v2015
    %2616 = vmatpush1.bf16.msra.mxu0 %v2014
    %2617 = vmatprep.subr.bf16.mxu0 %v2019
    %2618 = vmatpush1.bf16.msra.mxu0 %v2018
    %2619 = vmatprep.subr.bf16.mxu0 %v2023
    %2620 = vmatpush1.bf16.msra.mxu0 %v2022
    %2621 = vmatprep.subr.bf16.mxu0 %v2027
    %2622 = vmatpush1.bf16.msra.mxu0 %v2026
    %2623 = vmatprep.subr.bf16.mxu0 %v2031
    %2624 = vmatpush1.bf16.msra.mxu0 %v2030
    %2625 = vmatprep.subr.bf16.mxu0 %v2035
    %2626 = vmatpush1.bf16.msra.mxu0 %v2034
    %2627 = vmatprep.subr.bf16.mxu0 %v2039
    %2628 = vmatpush1.bf16.msra.mxu0 %v2038
    %2629 = vmatprep.mubr.bf16.mxu0 %v737
    %2630 = vmatmul.mubr.bf16.gmra.mrb[0].mxu0 %v736
    %v2631 = vpop.f32.mrb[0].mxu0
    %v2632 = vadd.f32 %v2589, %v2631
    %v2633 = vpop.f32.mrb[0].mxu0
    %v2634 = vadd.f32 %v2591, %v2633
    %v2635 = vpop.f32.mrb[0].mxu0
    %v2636 = vadd.f32 %v2593, %v2635
    %v2637 = vpop.f32.mrb[0].mxu0
    %v2638 = vadd.f32 %v2595, %v2637
    %2639 = vdwg.mxu0
    %v2640 = vmax.f32 %v2460, 0.0
    %v2641 = vmax.f32 %v2462, 0.0
    %v2642 = vmax.f32 %v2632, 0.0
    %v2643 = vmax.f32 %v2634, 0.0
    %v2644 = vmax.f32 %v2464, 0.0
    %v2645 = vmax.f32 %v2466, 0.0
    %v2646 = vmax.f32 %v2636, 0.0
    %v2647 = vmax.f32 %v2638, 0.0
    %v2648 = vpack.c.bf16 %v2644, %v2640
    %v2649 = vpack.c.bf16 %v2645, %v2641
    %v2650 = vpack.c.bf16 %v2646, %v2642
    %v2651 = vpack.c.bf16 %v2647, %v2643
    %v2652 = vld [vmem:[#allocation9] sm:$0xff]
    %v2653 = vld [vmem:[#allocation9 + $0x8] sm:$0xff]
    %v2654 = vld [vmem:[#allocation9 + $0x10] sm:$0xff]
    %v2655 = vld [vmem:[#allocation9 + $0x18] sm:$0xff]
    %v2656 = vld [vmem:[#allocation9 + $0x20] sm:$0xff]
    %v2657 = vld [vmem:[#allocation9 + $0x28] sm:$0xff]
    %v2658 = vld [vmem:[#allocation9 + $0x30] sm:$0xff]
    %v2659 = vld [vmem:[#allocation9 + $0x38] sm:$0xff]
    %v2660 = vld [vmem:[#allocation9 + $0x40] sm:$0xff]
    %v2661 = vld [vmem:[#allocation9 + $0x48] sm:$0xff]
    %v2662 = vld [vmem:[#allocation9 + $0x50] sm:$0xff]
    %v2663 = vld [vmem:[#allocation9 + $0x58] sm:$0xff]
    %v2664 = vld [vmem:[#allocation9 + $0x60] sm:$0xff]
    %v2665 = vld [vmem:[#allocation9 + $0x68] sm:$0xff]
    %v2666 = vld [vmem:[#allocation9 + $0x70] sm:$0xff]
    %v2667 = vld [vmem:[#allocation9 + $0x78] sm:$0xff]
    %v2668 = vld [vmem:[#allocation9 + $0x80] sm:$0xff]
    %v2669 = vld [vmem:[#allocation9 + $0x88] sm:$0xff]
    %v2670 = vld [vmem:[#allocation9 + $0x90] sm:$0xff]
    %v2671 = vld [vmem:[#allocation9 + $0x98] sm:$0xff]
    %v2672 = vld [vmem:[#allocation9 + $0xa0] sm:$0xff]
    %v2673 = vld [vmem:[#allocation9 + $0xa8] sm:$0xff]
    %v2674 = vld [vmem:[#allocation9 + $0xb0] sm:$0xff]
    %v2675 = vld [vmem:[#allocation9 + $0xb8] sm:$0xff]
    %v2676 = vld [vmem:[#allocation9 + $0xc0] sm:$0xff]
    %v2677 = vld [vmem:[#allocation9 + $0xc8] sm:$0xff]
    %v2678 = vld [vmem:[#allocation9 + $0xd0] sm:$0xff]
    %v2679 = vld [vmem:[#allocation9 + $0xd8] sm:$0xff]
    %v2680 = vld [vmem:[#allocation9 + $0xe0] sm:$0xff]
    %v2681 = vld [vmem:[#allocation9 + $0xe8] sm:$0xff]
    %v2682 = vld [vmem:[#allocation9 + $0xf0] sm:$0xff]
    %v2683 = vld [vmem:[#allocation9 + $0xf8] sm:$0xff]
    %v2684 = vld [vmem:[#allocation9 + $0x100] sm:$0xff]
    %v2685 = vld [vmem:[#allocation9 + $0x108] sm:$0xff]
    %v2686 = vld [vmem:[#allocation9 + $0x110] sm:$0xff]
    %v2687 = vld [vmem:[#allocation9 + $0x118] sm:$0xff]
    %v2688 = vld [vmem:[#allocation9 + $0x120] sm:$0xff]
    %v2689 = vld [vmem:[#allocation9 + $0x128] sm:$0xff]
    %v2690 = vld [vmem:[#allocation9 + $0x130] sm:$0xff]
    %v2691 = vld [vmem:[#allocation9 + $0x138] sm:$0xff]
    %v2692 = vld [vmem:[#allocation9 + $0x140] sm:$0xff]
    %v2693 = vld [vmem:[#allocation9 + $0x148] sm:$0xff]
    %v2694 = vld [vmem:[#allocation9 + $0x150] sm:$0xff]
    %v2695 = vld [vmem:[#allocation9 + $0x158] sm:$0xff]
    %v2696 = vld [vmem:[#allocation9 + $0x160] sm:$0xff]
    %v2697 = vld [vmem:[#allocation9 + $0x168] sm:$0xff]
    %v2698 = vld [vmem:[#allocation9 + $0x170] sm:$0xff]
    %v2699 = vld [vmem:[#allocation9 + $0x178] sm:$0xff]
    %v2700 = vld [vmem:[#allocation9 + $0x180] sm:$0xff]
    %v2701 = vld [vmem:[#allocation9 + $0x188] sm:$0xff]
    %v2702 = vld [vmem:[#allocation9 + $0x190] sm:$0xff]
    %v2703 = vld [vmem:[#allocation9 + $0x198] sm:$0xff]
    %v2704 = vld [vmem:[#allocation9 + $0x1a0] sm:$0xff]
    %v2705 = vld [vmem:[#allocation9 + $0x1a8] sm:$0xff]
    %v2706 = vld [vmem:[#allocation9 + $0x1b0] sm:$0xff]
    %v2707 = vld [vmem:[#allocation9 + $0x1b8] sm:$0xff]
    %v2708 = vld [vmem:[#allocation9 + $0x1c0] sm:$0xff]
    %v2709 = vld [vmem:[#allocation9 + $0x1c8] sm:$0xff]
    %v2710 = vld [vmem:[#allocation9 + $0x1d0] sm:$0xff]
    %v2711 = vld [vmem:[#allocation9 + $0x1d8] sm:$0xff]
    %v2712 = vld [vmem:[#allocation9 + $0x1e0] sm:$0xff]
    %v2713 = vld [vmem:[#allocation9 + $0x1e8] sm:$0xff]
    %v2714 = vld [vmem:[#allocation9 + $0x1f0] sm:$0xff]
    %v2715 = vld [vmem:[#allocation9 + $0x1f8] sm:$0xff]
    %v2716 = vld [vmem:[%s6] sm:$0x3]
    %v2718 = vlaneseq
    %v2719 = vshrl.u32 %v2718, 7
    %v2720 = vsub.s32 0, %v2719
    %v2721 = vrot.slane %v2716, %v2720
    %v2722 = vlaneseq
    %v2723 = vshrl.u32 %v2722, 7
    %v2724 = vsub.s32 1, %v2723
    %v2725 = vrot.slane %v2716, %v2724
    %v2792 = vunpack.c.l.b16 %v2652
    %v2793 = vunpack.c.h.b16 %v2652
    %v2794 = vunpack.c.l.b16 %v2653
    %v2795 = vunpack.c.h.b16 %v2653
    %v2796 = vunpack.c.l.b16 %v2654
    %v2797 = vunpack.c.h.b16 %v2654
    %v2798 = vunpack.c.l.b16 %v2655
    %v2799 = vunpack.c.h.b16 %v2655
    %v2800 = vunpack.c.l.b16 %v2656
    %v2801 = vunpack.c.h.b16 %v2656
    %v2802 = vunpack.c.l.b16 %v2657
    %v2803 = vunpack.c.h.b16 %v2657
    %v2804 = vunpack.c.l.b16 %v2658
    %v2805 = vunpack.c.h.b16 %v2658
    %v2806 = vunpack.c.l.b16 %v2659
    %v2807 = vunpack.c.h.b16 %v2659
    %v2808 = vunpack.c.l.b16 %v2660
    %v2809 = vunpack.c.h.b16 %v2660
    %v2810 = vunpack.c.l.b16 %v2661
    %v2811 = vunpack.c.h.b16 %v2661
    %v2812 = vunpack.c.l.b16 %v2662
    %v2813 = vunpack.c.h.b16 %v2662
    %v2814 = vunpack.c.l.b16 %v2663
    %v2815 = vunpack.c.h.b16 %v2663
    %v2816 = vunpack.c.l.b16 %v2664
    %v2817 = vunpack.c.h.b16 %v2664
    %v2818 = vunpack.c.l.b16 %v2665
    %v2819 = vunpack.c.h.b16 %v2665
    %v2820 = vunpack.c.l.b16 %v2666
    %v2821 = vunpack.c.h.b16 %v2666
    %v2822 = vunpack.c.l.b16 %v2667
    %v2823 = vunpack.c.h.b16 %v2667
    %v2824 = vunpack.c.l.b16 %v2668
    %v2825 = vunpack.c.h.b16 %v2668
    %v2826 = vunpack.c.l.b16 %v2669
    %v2827 = vunpack.c.h.b16 %v2669
    %v2828 = vunpack.c.l.b16 %v2670
    %v2829 = vunpack.c.h.b16 %v2670
    %v2830 = vunpack.c.l.b16 %v2671
    %v2831 = vunpack.c.h.b16 %v2671
    %v2832 = vunpack.c.l.b16 %v2672
    %v2833 = vunpack.c.h.b16 %v2672
    %v2834 = vunpack.c.l.b16 %v2673
    %v2835 = vunpack.c.h.b16 %v2673
    %v2836 = vunpack.c.l.b16 %v2674
    %v2837 = vunpack.c.h.b16 %v2674
    %v2838 = vunpack.c.l.b16 %v2675
    %v2839 = vunpack.c.h.b16 %v2675
    %v2840 = vunpack.c.l.b16 %v2676
    %v2841 = vunpack.c.h.b16 %v2676
    %v2842 = vunpack.c.l.b16 %v2677
    %v2843 = vunpack.c.h.b16 %v2677
    %v2844 = vunpack.c.l.b16 %v2678
    %v2845 = vunpack.c.h.b16 %v2678
    %v2846 = vunpack.c.l.b16 %v2679
    %v2847 = vunpack.c.h.b16 %v2679
    %v2848 = vunpack.c.l.b16 %v2680
    %v2849 = vunpack.c.h.b16 %v2680
    %v2850 = vunpack.c.l.b16 %v2681
    %v2851 = vunpack.c.h.b16 %v2681
    %v2852 = vunpack.c.l.b16 %v2682
    %v2853 = vunpack.c.h.b16 %v2682
    %v2854 = vunpack.c.l.b16 %v2683
    %v2855 = vunpack.c.h.b16 %v2683
    %v2856 = vunpack.c.l.b16 %v2684
    %v2857 = vunpack.c.h.b16 %v2684
    %v2858 = vunpack.c.l.b16 %v2685
    %v2859 = vunpack.c.h.b16 %v2685
    %v2860 = vunpack.c.l.b16 %v2686
    %v2861 = vunpack.c.h.b16 %v2686
    %v2862 = vunpack.c.l.b16 %v2687
    %v2863 = vunpack.c.h.b16 %v2687
    %v2864 = vunpack.c.l.b16 %v2688
    %v2865 = vunpack.c.h.b16 %v2688
    %v2866 = vunpack.c.l.b16 %v2689
    %v2867 = vunpack.c.h.b16 %v2689
    %v2868 = vunpack.c.l.b16 %v2690
    %v2869 = vunpack.c.h.b16 %v2690
    %v2870 = vunpack.c.l.b16 %v2691
    %v2871 = vunpack.c.h.b16 %v2691
    %v2872 = vunpack.c.l.b16 %v2692
    %v2873 = vunpack.c.h.b16 %v2692
    %v2874 = vunpack.c.l.b16 %v2693
    %v2875 = vunpack.c.h.b16 %v2693
    %v2876 = vunpack.c.l.b16 %v2694
    %v2877 = vunpack.c.h.b16 %v2694
    %v2878 = vunpack.c.l.b16 %v2695
    %v2879 = vunpack.c.h.b16 %v2695
    %v2880 = vunpack.c.l.b16 %v2696
    %v2881 = vunpack.c.h.b16 %v2696
    %v2882 = vunpack.c.l.b16 %v2697
    %v2883 = vunpack.c.h.b16 %v2697
    %v2884 = vunpack.c.l.b16 %v2698
    %v2885 = vunpack.c.h.b16 %v2698
    %v2886 = vunpack.c.l.b16 %v2699
    %v2887 = vunpack.c.h.b16 %v2699
    %v2888 = vunpack.c.l.b16 %v2700
    %v2889 = vunpack.c.h.b16 %v2700
    %v2890 = vunpack.c.l.b16 %v2701
    %v2891 = vunpack.c.h.b16 %v2701
    %v2892 = vunpack.c.l.b16 %v2702
    %v2893 = vunpack.c.h.b16 %v2702
    %v2894 = vunpack.c.l.b16 %v2703
    %v2895 = vunpack.c.h.b16 %v2703
    %v2896 = vunpack.c.l.b16 %v2704
    %v2897 = vunpack.c.h.b16 %v2704
    %v2898 = vunpack.c.l.b16 %v2705
    %v2899 = vunpack.c.h.b16 %v2705
    %v2900 = vunpack.c.l.b16 %v2706
    %v2901 = vunpack.c.h.b16 %v2706
    %v2902 = vunpack.c.l.b16 %v2707
    %v2903 = vunpack.c.h.b16 %v2707
    %v2904 = vunpack.c.l.b16 %v2708
    %v2905 = vunpack.c.h.b16 %v2708
    %v2906 = vunpack.c.l.b16 %v2709
    %v2907 = vunpack.c.h.b16 %v2709
    %v2908 = vunpack.c.l.b16 %v2710
    %v2909 = vunpack.c.h.b16 %v2710
    %v2910 = vunpack.c.l.b16 %v2711
    %v2911 = vunpack.c.h.b16 %v2711
    %v2912 = vunpack.c.l.b16 %v2712
    %v2913 = vunpack.c.h.b16 %v2712
    %v2914 = vunpack.c.l.b16 %v2713
    %v2915 = vunpack.c.h.b16 %v2713
    %v2916 = vunpack.c.l.b16 %v2714
    %v2917 = vunpack.c.h.b16 %v2714
    %v2918 = vunpack.c.l.b16 %v2715
    %v2919 = vunpack.c.h.b16 %v2715
    %v2920 = vpack.c.b16 %v2794, %v2792
    %v2921 = vpack.c.b16 %v2795, %v2793
    %v2922 = vpack.c.b16 %v2798, %v2796
    %v2923 = vpack.c.b16 %v2799, %v2797
    %v2924 = vpack.c.b16 %v2802, %v2800
    %v2925 = vpack.c.b16 %v2803, %v2801
    %v2926 = vpack.c.b16 %v2806, %v2804
    %v2927 = vpack.c.b16 %v2807, %v2805
    %v2928 = vpack.c.b16 %v2810, %v2808
    %v2929 = vpack.c.b16 %v2811, %v2809
    %v2930 = vpack.c.b16 %v2814, %v2812
    %v2931 = vpack.c.b16 %v2815, %v2813
    %v2932 = vpack.c.b16 %v2818, %v2816
    %v2933 = vpack.c.b16 %v2819, %v2817
    %v2934 = vpack.c.b16 %v2822, %v2820
    %v2935 = vpack.c.b16 %v2823, %v2821
    %v2936 = vpack.c.b16 %v2826, %v2824
    %v2937 = vpack.c.b16 %v2827, %v2825
    %v2938 = vpack.c.b16 %v2830, %v2828
    %v2939 = vpack.c.b16 %v2831, %v2829
    %v2940 = vpack.c.b16 %v2834, %v2832
    %v2941 = vpack.c.b16 %v2835, %v2833
    %v2942 = vpack.c.b16 %v2838, %v2836
    %v2943 = vpack.c.b16 %v2839, %v2837
    %v2944 = vpack.c.b16 %v2842, %v2840
    %v2945 = vpack.c.b16 %v2843, %v2841
    %v2946 = vpack.c.b16 %v2846, %v2844
    %v2947 = vpack.c.b16 %v2847, %v2845
    %v2948 = vpack.c.b16 %v2850, %v2848
    %v2949 = vpack.c.b16 %v2851, %v2849
    %v2950 = vpack.c.b16 %v2854, %v2852
    %v2951 = vpack.c.b16 %v2855, %v2853
    %v2952 = vpack.c.b16 %v2858, %v2856
    %v2953 = vpack.c.b16 %v2859, %v2857
    %v2954 = vpack.c.b16 %v2862, %v2860
    %v2955 = vpack.c.b16 %v2863, %v2861
    %v2956 = vpack.c.b16 %v2866, %v2864
    %v2957 = vpack.c.b16 %v2867, %v2865
    %v2958 = vpack.c.b16 %v2870, %v2868
    %v2959 = vpack.c.b16 %v2871, %v2869
    %v2960 = vpack.c.b16 %v2874, %v2872
    %v2961 = vpack.c.b16 %v2875, %v2873
    %v2962 = vpack.c.b16 %v2878, %v2876
    %v2963 = vpack.c.b16 %v2879, %v2877
    %v2964 = vpack.c.b16 %v2882, %v2880
    %v2965 = vpack.c.b16 %v2883, %v2881
    %v2966 = vpack.c.b16 %v2886, %v2884
    %v2967 = vpack.c.b16 %v2887, %v2885
    %v2968 = vpack.c.b16 %v2890, %v2888
    %v2969 = vpack.c.b16 %v2891, %v2889
    %v2970 = vpack.c.b16 %v2894, %v2892
    %v2971 = vpack.c.b16 %v2895, %v2893
    %v2972 = vpack.c.b16 %v2898, %v2896
    %v2973 = vpack.c.b16 %v2899, %v2897
    %v2974 = vpack.c.b16 %v2902, %v2900
    %v2975 = vpack.c.b16 %v2903, %v2901
    %v2976 = vpack.c.b16 %v2906, %v2904
    %v2977 = vpack.c.b16 %v2907, %v2905
    %v2978 = vpack.c.b16 %v2910, %v2908
    %v2979 = vpack.c.b16 %v2911, %v2909
    %v2980 = vpack.c.b16 %v2914, %v2912
    %v2981 = vpack.c.b16 %v2915, %v2913
    %v2982 = vpack.c.b16 %v2918, %v2916
    %v2983 = vpack.c.b16 %v2919, %v2917
    %3048 = vmatprep.subr.bf16.mxu0 %v2921
    %3049 = vmatpush1.bf16.msra.mxu0 %v2920
    %3050 = vmatprep.subr.bf16.mxu0 %v2923
    %3051 = vmatpush1.bf16.msra.mxu0 %v2922
    %3052 = vmatprep.subr.bf16.mxu0 %v2925
    %3053 = vmatpush1.bf16.msra.mxu0 %v2924
    %3054 = vmatprep.subr.bf16.mxu0 %v2927
    %3055 = vmatpush1.bf16.msra.mxu0 %v2926
    %3056 = vmatprep.subr.bf16.mxu0 %v2929
    %3057 = vmatpush1.bf16.msra.mxu0 %v2928
    %3058 = vmatprep.subr.bf16.mxu0 %v2931
    %3059 = vmatpush1.bf16.msra.mxu0 %v2930
    %3060 = vmatprep.subr.bf16.mxu0 %v2933
    %3061 = vmatpush1.bf16.msra.mxu0 %v2932
    %3062 = vmatprep.subr.bf16.mxu0 %v2935
    %3063 = vmatpush1.bf16.msra.mxu0 %v2934
    %3064 = vmatprep.subr.bf16.mxu0 %v2937
    %3065 = vmatpush1.bf16.msra.mxu0 %v2936
    %3066 = vmatprep.subr.bf16.mxu0 %v2939
    %3067 = vmatpush1.bf16.msra.mxu0 %v2938
    %3068 = vmatprep.subr.bf16.mxu0 %v2941
    %3069 = vmatpush1.bf16.msra.mxu0 %v2940
    %3070 = vmatprep.subr.bf16.mxu0 %v2943
    %3071 = vmatpush1.bf16.msra.mxu0 %v2942
    %3072 = vmatprep.subr.bf16.mxu0 %v2945
    %3073 = vmatpush1.bf16.msra.mxu0 %v2944
    %3074 = vmatprep.subr.bf16.mxu0 %v2947
    %3075 = vmatpush1.bf16.msra.mxu0 %v2946
    %3076 = vmatprep.subr.bf16.mxu0 %v2949
    %3077 = vmatpush1.bf16.msra.mxu0 %v2948
    %3078 = vmatprep.subr.bf16.mxu0 %v2951
    %3079 = vmatpush1.bf16.msra.mxu0 %v2950
    %3080 = vmatprep.mubr.bf16.mxu0 %v2649
    %3081 = vmatmul.mubr.bf16.gmra.mrb[0].mxu0 %v2648
    %v3082 = vpop.f32.mrb[0].mxu0
    %v3083 = vadd.f32 %v2721, %v3082
    %v3084 = vpop.f32.mrb[0].mxu0
    %v3085 = vadd.f32 %v2725, %v3084
    %v3086 = vpop.f32.mrb[0].mxu0
    %v3087 = vadd.f32 %v2721, %v3086
    %v3088 = vpop.f32.mrb[0].mxu0
    %v3089 = vadd.f32 %v2725, %v3088
    %3090 = vdwg.mxu0
    %3091 = vmatprep.subr.bf16.mxu0 %v2953
    %3092 = vmatpush1.bf16.msra.mxu0 %v2952
    %3093 = vmatprep.subr.bf16.mxu0 %v2955
    %3094 = vmatpush1.bf16.msra.mxu0 %v2954
    %3095 = vmatprep.subr.bf16.mxu0 %v2957
    %3096 = vmatpush1.bf16.msra.mxu0 %v2956
    %3097 = vmatprep.subr.bf16.mxu0 %v2959
    %3098 = vmatpush1.bf16.msra.mxu0 %v2958
    %3099 = vmatprep.subr.bf16.mxu0 %v2961
    %3100 = vmatpush1.bf16.msra.mxu0 %v2960
    %3101 = vmatprep.subr.bf16.mxu0 %v2963
    %3102 = vmatpush1.bf16.msra.mxu0 %v2962
    %3103 = vmatprep.subr.bf16.mxu0 %v2965
    %3104 = vmatpush1.bf16.msra.mxu0 %v2964
    %3105 = vmatprep.subr.bf16.mxu0 %v2967
    %3106 = vmatpush1.bf16.msra.mxu0 %v2966
    %3107 = vmatprep.subr.bf16.mxu0 %v2969
    %3108 = vmatpush1.bf16.msra.mxu0 %v2968
    %3109 = vmatprep.subr.bf16.mxu0 %v2971
    %3110 = vmatpush1.bf16.msra.mxu0 %v2970
    %3111 = vmatprep.subr.bf16.mxu0 %v2973
    %3112 = vmatpush1.bf16.msra.mxu0 %v2972
    %3113 = vmatprep.subr.bf16.mxu0 %v2975
    %3114 = vmatpush1.bf16.msra.mxu0 %v2974
    %3115 = vmatprep.subr.bf16.mxu0 %v2977
    %3116 = vmatpush1.bf16.msra.mxu0 %v2976
    %3117 = vmatprep.subr.bf16.mxu0 %v2979
    %3118 = vmatpush1.bf16.msra.mxu0 %v2978
    %3119 = vmatprep.subr.bf16.mxu0 %v2981
    %3120 = vmatpush1.bf16.msra.mxu0 %v2980
    %3121 = vmatprep.subr.bf16.mxu0 %v2983
    %3122 = vmatpush1.bf16.msra.mxu0 %v2982
    %3123 = vmatprep.mubr.bf16.mxu0 %v2651
    %3124 = vmatmul.mubr.bf16.gmra.mrb[0].mxu0 %v2650
    %v3125 = vpop.f32.mrb[0].mxu0
    %v3126 = vadd.f32 %v3083, %v3125
    %v3127 = vpop.f32.mrb[0].mxu0
    %v3128 = vadd.f32 %v3085, %v3127
    %v3129 = vpop.f32.mrb[0].mxu0
    %v3130 = vadd.f32 %v3087, %v3129
    %v3131 = vpop.f32.mrb[0].mxu0
    %v3132 = vadd.f32 %v3089, %v3131
    %3133 = vdwg.mxu0
    %v3134 = vmax.f32 %v3126, 0.0
    %v3135 = vmax.f32 %v3128, 0.0
    %v3136 = vmax.f32 %v3130, 0.0
    %v3137 = vmax.f32 %v3132, 0.0
    %v3138 = vpack.c.bf16 %v3136, %v3134
    %v3139 = vpack.c.bf16 %v3137, %v3135
    %v3140 = vld [vmem:[#allocation10] sm:$0xf]
    %v3141 = vld [vmem:[#allocation10 + $0x4] sm:$0xf]
    %v3142 = vld [vmem:[#allocation10 + $0x8] sm:$0xf]
    %v3143 = vld [vmem:[#allocation10 + $0xc] sm:$0xf]
    %v3144 = vld [vmem:[#allocation10 + $0x10] sm:$0xf]
    %v3145 = vld [vmem:[#allocation10 + $0x14] sm:$0xf]
    %v3146 = vld [vmem:[#allocation10 + $0x18] sm:$0xf]
    %v3147 = vld [vmem:[#allocation10 + $0x1c] sm:$0xf]
    %v3148 = vld [vmem:[#allocation10 + $0x20] sm:$0xf]
    %v3149 = vld [vmem:[#allocation10 + $0x24] sm:$0xf]
    %v3150 = vld [vmem:[#allocation10 + $0x28] sm:$0xf]
    %v3151 = vld [vmem:[#allocation10 + $0x2c] sm:$0xf]
    %v3152 = vld [vmem:[#allocation10 + $0x30] sm:$0xf]
    %v3153 = vld [vmem:[#allocation10 + $0x34] sm:$0xf]
    %v3154 = vld [vmem:[#allocation10 + $0x38] sm:$0xf]
    %v3155 = vld [vmem:[#allocation10 + $0x3c] sm:$0xf]
    %v3156 = vld [vmem:[#allocation10 + $0x40] sm:$0xf]
    %v3157 = vld [vmem:[#allocation10 + $0x44] sm:$0xf]
    %v3158 = vld [vmem:[#allocation10 + $0x48] sm:$0xf]
    %v3159 = vld [vmem:[#allocation10 + $0x4c] sm:$0xf]
    %v3160 = vld [vmem:[#allocation10 + $0x50] sm:$0xf]
    %v3161 = vld [vmem:[#allocation10 + $0x54] sm:$0xf]
    %v3162 = vld [vmem:[#allocation10 + $0x58] sm:$0xf]
    %v3163 = vld [vmem:[#allocation10 + $0x5c] sm:$0xf]
    %v3164 = vld [vmem:[#allocation10 + $0x60] sm:$0xf]
    %v3165 = vld [vmem:[#allocation10 + $0x64] sm:$0xf]
    %v3166 = vld [vmem:[#allocation10 + $0x68] sm:$0xf]
    %v3167 = vld [vmem:[#allocation10 + $0x6c] sm:$0xf]
    %v3168 = vld [vmem:[#allocation10 + $0x70] sm:$0xf]
    %v3169 = vld [vmem:[#allocation10 + $0x74] sm:$0xf]
    %v3170 = vld [vmem:[#allocation10 + $0x78] sm:$0xf]
    %v3171 = vld [vmem:[#allocation10 + $0x7c] sm:$0xf]
    %v3172 = vld [vmem:[%s8] sm:$0x1]
    %v3174 = vlaneseq
    %v3175 = vshrl.u32 %v3174, 7
    %v3176 = vsub.s32 0, %v3175
    %v3177 = vrot.slane %v3172, %v3176
    %v3211 = vunpack.c.l.b16 %v3140
    %v3212 = vunpack.c.l.b16 %v3141
    %v3213 = vunpack.c.l.b16 %v3142
    %v3214 = vunpack.c.l.b16 %v3143
    %v3215 = vunpack.c.l.b16 %v3144
    %v3216 = vunpack.c.l.b16 %v3145
    %v3217 = vunpack.c.l.b16 %v3146
    %v3218 = vunpack.c.l.b16 %v3147
    %v3219 = vunpack.c.l.b16 %v3148
    %v3220 = vunpack.c.l.b16 %v3149
    %v3221 = vunpack.c.l.b16 %v3150
    %v3222 = vunpack.c.l.b16 %v3151
    %v3223 = vunpack.c.l.b16 %v3152
    %v3224 = vunpack.c.l.b16 %v3153
    %v3225 = vunpack.c.l.b16 %v3154
    %v3226 = vunpack.c.l.b16 %v3155
    %v3227 = vunpack.c.l.b16 %v3156
    %v3228 = vunpack.c.l.b16 %v3157
    %v3229 = vunpack.c.l.b16 %v3158
    %v3230 = vunpack.c.l.b16 %v3159
    %v3231 = vunpack.c.l.b16 %v3160
    %v3232 = vunpack.c.l.b16 %v3161
    %v3233 = vunpack.c.l.b16 %v3162
    %v3234 = vunpack.c.l.b16 %v3163
    %v3235 = vunpack.c.l.b16 %v3164
    %v3236 = vunpack.c.l.b16 %v3165
    %v3237 = vunpack.c.l.b16 %v3166
    %v3238 = vunpack.c.l.b16 %v3167
    %v3239 = vunpack.c.l.b16 %v3168
    %v3240 = vunpack.c.l.b16 %v3169
    %v3241 = vunpack.c.l.b16 %v3170
    %v3242 = vunpack.c.l.b16 %v3171
    %v3243 = vpack.c.b16 %v3212, %v3211
    %v3244 = vpack.c.b16 %v3214, %v3213
    %v3245 = vpack.c.b16 %v3216, %v3215
    %v3246 = vpack.c.b16 %v3218, %v3217
    %v3247 = vpack.c.b16 %v3220, %v3219
    %v3248 = vpack.c.b16 %v3222, %v3221
    %v3249 = vpack.c.b16 %v3224, %v3223
    %v3250 = vpack.c.b16 %v3226, %v3225
    %v3251 = vpack.c.b16 %v3228, %v3227
    %v3252 = vpack.c.b16 %v3230, %v3229
    %v3253 = vpack.c.b16 %v3232, %v3231
    %v3254 = vpack.c.b16 %v3234, %v3233
    %v3255 = vpack.c.b16 %v3236, %v3235
    %v3256 = vpack.c.b16 %v3238, %v3237
    %v3257 = vpack.c.b16 %v3240, %v3239
    %v3258 = vpack.c.b16 %v3242, %v3241
    %3275 = vmatprep.subr.bf16.mxu0 0
    %3276 = vmatpush1.bf16.msra.mxu0 %v3243
    %3277 = vmatprep.subr.bf16.mxu0 0
    %3278 = vmatpush1.bf16.msra.mxu0 %v3244
    %3279 = vmatprep.subr.bf16.mxu0 0
    %3280 = vmatpush1.bf16.msra.mxu0 %v3245
    %3281 = vmatprep.subr.bf16.mxu0 0
    %3282 = vmatpush1.bf16.msra.mxu0 %v3246
    %3283 = vmatprep.subr.bf16.mxu0 0
    %3284 = vmatpush1.bf16.msra.mxu0 %v3247
    %3285 = vmatprep.subr.bf16.mxu0 0
    %3286 = vmatpush1.bf16.msra.mxu0 %v3248
    %3287 = vmatprep.subr.bf16.mxu0 0
    %3288 = vmatpush1.bf16.msra.mxu0 %v3249
    %3289 = vmatprep.subr.bf16.mxu0 0
    %3290 = vmatpush1.bf16.msra.mxu0 %v3250
    %3291 = vmatprep.subr.bf16.mxu0 0
    %3292 = vmatpush1.bf16.msra.mxu0 %v3251
    %3293 = vmatprep.subr.bf16.mxu0 0
    %3294 = vmatpush1.bf16.msra.mxu0 %v3252
    %3295 = vmatprep.subr.bf16.mxu0 0
    %3296 = vmatpush1.bf16.msra.mxu0 %v3253
    %3297 = vmatprep.subr.bf16.mxu0 0
    %3298 = vmatpush1.bf16.msra.mxu0 %v3254
    %3299 = vmatprep.subr.bf16.mxu0 0
    %3300 = vmatpush1.bf16.msra.mxu0 %v3255
    %3301 = vmatprep.subr.bf16.mxu0 0
    %3302 = vmatpush1.bf16.msra.mxu0 %v3256
    %3303 = vmatprep.subr.bf16.mxu0 0
    %3304 = vmatpush1.bf16.msra.mxu0 %v3257
    %3305 = vmatprep.subr.bf16.mxu0 0
    %3306 = vmatpush1.bf16.msra.mxu0 %v3258
    %3307 = vmatprep.mubr.bf16.mxu0 %v3139
    %3308 = vmatmul.mubr.bf16.gmra.mrb[0].mxu0 %v3138
    %v3309 = vpop.f32.mrb[0].mxu0
    %v3310 = vadd.f32 %v3177, %v3309
    %v3311 = vpop.f32.mrb[0].mxu0
    %v3312 = vpop.f32.mrb[0].mxu0
    %v3313 = vadd.f32 %v3177, %v3312
    %v3314 = vpop.f32.mrb[0].mxu0
    %3315 = vdwg.mxu0
    %3316 = vst [vmem:[%s9] sm:$0xff] %v3310
    %3317 = vst [vmem:[%s9 + $0x8] sm:$0xff] %v3313
    // Predicated region
    $region62: #{improved_nn_forward.1} parent=1 // pred_check
      _
    $region63: #{improved_nn_forward.1} parent=1 // pred_check_branch
      %3319 = sbr.rel (0) target = $region65
    $region64: #{improved_nn_forward.1} parent=1 // pred_region
      _
    $region65: #{improved_nn_forward.1} parent=1 // pred_fallthru
      _
    // Predicated region
    $region66: #{improved_nn_forward.1} parent=1 // pred_check
      _
    $region67: #{improved_nn_forward.1} parent=1 // pred_check_branch
      %3321 = sbr.rel (0) target = $region69
    $region68: #{improved_nn_forward.1} parent=1 // pred_region
      _
    $region69: #{improved_nn_forward.1} parent=1 // pred_fallthru
      _
    %3322 = vsyncpa [#allocation3], 1
    %3323 = vsyncpa [#allocation5], 1
    %3324 = vsyncpa [#allocation8], 1
    %3325 = vsyncpa [#allocation11], 1

</llo_original>
